<compile_context>
chip_gen: v6e
topology: v6e:2x2x1
jax: 0.10.0
libtpu: 0.0.40
codegen_flags: <defaults>
</compile_context>

<pallas_src>
import jax
import jax.numpy as jnp
from jax import lax
from jax.experimental import pallas as pl
from jax.experimental.pallas import tpu as pltpu

# Problem sizes (DenseUnit(in_c=4, k_factor=12, k_size=3)).
N, C, D, H, W = 2, 4, 8, 8, 8
K = 12                     # k_factor (output channels)
KP = 16                    # padded output channels -> W*KP = 128 lanes
KS = 3                     # conv kernel size
EPS = 1e-5                 # BatchNorm eps
DP = D + 2                 # d axis of the padded-activation scratch (leading, free offsets)
HS = 3 * H                 # h axis of the scratch: [8 zero | 8 interior | 8 zero] (tile aligned)
WC = W * C                 # merged (w, c) lane dim of the activation = 32
WK = W * KP                # merged (w, k) lane dim of the output     = 128


def dense_unit_kernel(x_ref, scale_ref, shift_ref, w_ref, b_ref, o_ref, apad_ref):
    """Fused BN(affine) -> ELU -> Conv3d(3x3x3, pad=1) for one batch element.

    x_ref:     (1, D*H, W*C)      channels-last activation rows (d*H + h, w*C + c)
    scale_ref: (1, W*C)           per-channel BN scale tiled over w
    shift_ref: (1, W*C)           per-channel BN shift tiled over w
    w_ref:     (KS*KS, W*C, W*KP) per-(kd, kh) weight block, kw + w-boundary folded in
    b_ref:     (1, W*KP)          conv bias tiled over w (zero for pad channels)
    o_ref:     (1, D*H, W*KP)
    apad_ref:  (DP, 3*H, W*C)     VMEM scratch: zero-padded activation
    """
    # ---- BatchNorm (precomputed scale/shift) + ELU(alpha=1) ----
    x = x_ref[0]                                          # (64, 32)
    xn = x * scale_ref[...] + shift_ref[...]
    # exp(min(x,0)) - 1 instead of expm1: absolute error ~f32 eps (inside tolerance) and
    # exp is guaranteed to lower on the Mosaic EUP path.
    a = jnp.where(xn > 0, xn, jnp.exp(jnp.minimum(xn, 0.0)) - 1.0)

    # ---- zero-padded activation in VMEM (no HBM round trip) ----
    # Zero only the halo; the interior is overwritten below.  Every partial store is
    # sublane-tile aligned (rows 0..7 / 8..15 / 16..23 of the 24-row axis, full lanes).
    zero_plane = jnp.zeros((HS, WC), jnp.float32)
    zero_halo = jnp.zeros((D, H, WC), jnp.float32)
    apad_ref[0] = zero_plane                              # d = -1 plane
    apad_ref[DP - 1] = zero_plane                         # d = D plane
    apad_ref[1:1 + D, 0:H, :] = zero_halo                 # h = -1 halo rows
    apad_ref[1:1 + D, 2 * H:3 * H, :] = zero_halo         # h = H halo rows
    apad_ref[1:1 + D, H:2 * H, :] = a.reshape(D, H, WC)   # interior (tile-aligned store)

    # ---- Conv3d: 9 (kd, kh) taps, each one (D*H, W*C) @ (W*C, W*KP) MXU matmul ----
    # Accumulator starts from the broadcast bias row (saves a zeros init + final add).
    acc = jnp.broadcast_to(b_ref[...], (D * H, WK)).astype(jnp.float32)
    for i in range(KS):            # kd tap: leading-axis offset (free)
        for j in range(KS):        # kh tap: sublane offset 7/8/9 (8 is tile-aligned)
            lhs = apad_ref[i:i + D, H - 1 + j:2 * H - 1 + j, :].reshape(D * H, WC)
            acc = acc + jnp.dot(lhs, w_ref[i * KS + j],
                                preferred_element_type=jnp.float32)
    o_ref[0] = acc.astype(o_ref.dtype)                    # lane-dense (64, 128) store


def fold_weights(wt, bconv):
    """Weight-only preprocessing, hoisted out of the forward hot path.

    wt: (K, C, KS, KS, KS), bconv: (K,).
    For tap (kd=i, kh=j):
      wbd[i*KS+j, p*C+c, w*KP+k] = wt[k, c, i, j, p-w+1]  if 0 <= p-w+1 < KS else 0,
    which also encodes the zero padding of the w boundary (out-of-range taps dropped).
    """
    wtp = jnp.pad(wt, ((0, KP - K), (0, 0), (0, 0), (0, 0), (0, 0)))      # (KP, C, 3, 3, 3)
    l = jnp.arange(KS)[:, None, None]
    p = jnp.arange(W)[None, :, None]
    w = jnp.arange(W)[None, None, :]
    sel = (p == w + l - 1).astype(wt.dtype)                               # (KS, W, W)
    wbd = jnp.einsum('lpw,kcijl->ijpcwk', sel, wtp).reshape(KS * KS, WC, WK)
    bias_row = jnp.tile(jnp.pad(bconv, (0, KP - K)), W)[None, :]          # (1, W*KP)
    return wbd, bias_row


@jax.jit
def dense_unit_forward(x, gamma, beta, wbd, bias_row):
    """x: (N, C, D, H, W) f32 -> (N, K, D, H, W) f32."""
    # Train-mode batch statistics (biased variance) -> per-channel affine (tiny XLA reduction).
    mean = jnp.mean(x, axis=(0, 2, 3, 4))                                 # (C,)
    xc = x - mean[None, :, None, None, None]
    var = jnp.mean(xc * xc, axis=(0, 2, 3, 4))                            # (C,)
    scale = gamma * lax.rsqrt(var + EPS)
    shift = beta - mean * scale
    scale_row = jnp.tile(scale, W)[None, :]                               # (1, W*C)
    shift_row = jnp.tile(shift, W)[None, :]

    # NCDHW -> channels-last rows (d*H + h, w*C + c); boundary layout op only.
    xr = jnp.transpose(x, (0, 2, 3, 4, 1)).reshape(N, D * H, WC)

    out = pl.pallas_call(
        dense_unit_kernel,
        out_shape=jax.ShapeDtypeStruct((N, D * H, WK), jnp.float32),
        grid=(N,),
        in_specs=[
            pl.BlockSpec((1, D * H, WC), lambda n: (n, 0, 0)),
            pl.BlockSpec((1, WC), lambda n: (0, 0)),
            pl.BlockSpec((1, WC), lambda n: (0, 0)),
            pl.BlockSpec((KS * KS, WC, WK), lambda n: (0, 0, 0)),
            pl.BlockSpec((1, WK), lambda n: (0, 0)),
        ],
        out_specs=pl.BlockSpec((1, D * H, WK), lambda n: (n, 0, 0)),
        scratch_shapes=[pltpu.VMEM((DP, HS, WC), jnp.float32)],
        compiler_params=pltpu.CompilerParams(dimension_semantics=("parallel",)),
    )(xr, scale_row, shift_row, wbd, bias_row)

    # Drop the pad channels and return to NCDHW.
    y = out.reshape(N, D, H, W, KP)[..., :K]
    return jnp.transpose(y, (0, 4, 1, 2, 3))


if __name__ == "__main__":
    key = jax.random.PRNGKey(0)
    k1, k2, k3, k4, k5 = jax.random.split(key, 5)
    # Deterministic synthetic parameters (shapes from DenseUnit.__init__).
    x = jax.random.normal(k1, (N, C, D, H, W), dtype=jnp.float32)
    gamma = 1.0 + 0.1 * jax.random.normal(k2, (C,), dtype=jnp.float32)        # norm0.weight
    beta = 0.1 * jax.random.normal(k3, (C,), dtype=jnp.float32)               # norm0.bias
    wt = 0.1 * jax.random.normal(k4, (K, C, KS, KS, KS), dtype=jnp.float32)   # conv0.weight
    bconv = 0.1 * jax.random.normal(k5, (K,), dtype=jnp.float32)              # conv0.bias

    # Weight-only folding: done once, outside the per-forward hot path.
    wbd, bias_row = fold_weights(wt, bconv)

    y = jax.block_until_ready(dense_unit_forward(x, gamma, beta, wbd, bias_row))

    # Pure-JAX reference: train-mode BatchNorm3d -> ELU -> Conv3d(pad=1).
    mean = x.mean(axis=(0, 2, 3, 4), keepdims=True)
    var = ((x - mean) ** 2).mean(axis=(0, 2, 3, 4), keepdims=True)
    xn = (x - mean) / jnp.sqrt(var + EPS) * gamma.reshape(1, C, 1, 1, 1) \
        + beta.reshape(1, C, 1, 1, 1)
    a_ref = jax.nn.elu(xn)
    y_ref = lax.conv_general_dilated(
        a_ref, wt, window_strides=(1, 1, 1), padding=((1, 1),) * 3,
        dimension_numbers=("NCDHW", "OIDHW", "NCDHW")) + bconv.reshape(1, K, 1, 1, 1)

    err = float(jnp.max(jnp.abs(y - y_ref)))
    assert err < 1e-3, f"max abs err {err}"
    print("KERNEL_OK")
</pallas_src>

<mosaic_0001>
module attributes {stable_mosaic.version = 11 : i64} {
  func.func @dense_unit_kernel(%arg0: i32, %arg1: memref<1x64x32xf32, #tpu.memory_space<vmem>>, %arg2: memref<1x32xf32, #tpu.memory_space<vmem>>, %arg3: memref<1x32xf32, #tpu.memory_space<vmem>>, %arg4: memref<9x32x128xf32, #tpu.memory_space<vmem>>, %arg5: memref<1x128xf32, #tpu.memory_space<vmem>>, %arg6: memref<1x64x128xf32, #tpu.memory_space<vmem>>, %arg7: memref<10x24x32xf32, #tpu.memory_space<vmem>>) attributes {dimension_semantics = [#tpu.dimension_semantics<parallel>], iteration_bounds = array<i64: 2>, scalar_prefetch = 0 : i64, scratch_operands = 1 : i64, tpu.core_type = #tpu.core_type<tc>, window_params = [{transform_indices = @transform_0, window_bounds = array<i64: 1, 64, 32>}, {pipeline_mode = #tpu.pipeline_mode<synchronous>, transform_indices = @transform_1, window_bounds = array<i64: 1, 32>}, {pipeline_mode = #tpu.pipeline_mode<synchronous>, transform_indices = @transform_2, window_bounds = array<i64: 1, 32>}, {pipeline_mode = #tpu.pipeline_mode<synchronous>, transform_indices = @transform_3, window_bounds = array<i64: 9, 32, 128>}, {pipeline_mode = #tpu.pipeline_mode<synchronous>, transform_indices = @transform_4, window_bounds = array<i64: 1, 128>}, {transform_indices = @transform_5, window_bounds = array<i64: 1, 64, 128>}]} {
    %c0 = arith.constant 0 : index
    %c0_0 = arith.constant 0 : index
    %c0_1 = arith.constant 0 : index
    %0 = vector.load %arg1[%c0, %c0_0, %c0_1] : memref<1x64x32xf32, #tpu.memory_space<vmem>>, vector<1x64x32xf32>
    %1 = vector.shape_cast %0 : vector<1x64x32xf32> to vector<64x32xf32>
    %c0_2 = arith.constant 0 : index
    %c0_3 = arith.constant 0 : index
    %2 = vector.load %arg2[%c0_2, %c0_3] : memref<1x32xf32, #tpu.memory_space<vmem>>, vector<1x32xf32>
    %3 = vector.broadcast %2 : vector<1x32xf32> to vector<64x32xf32>
    %4 = arith.mulf %1, %3 : vector<64x32xf32>
    %c0_4 = arith.constant 0 : index
    %c0_5 = arith.constant 0 : index
    %5 = vector.load %arg3[%c0_4, %c0_5] : memref<1x32xf32, #tpu.memory_space<vmem>>, vector<1x32xf32>
    %6 = vector.broadcast %5 : vector<1x32xf32> to vector<64x32xf32>
    %7 = arith.addf %4, %6 : vector<64x32xf32>
    %cst = arith.constant 0.000000e+00 : f32
    %8 = vector.broadcast %cst : f32 to vector<64x32xf32>
    %9 = arith.cmpf ogt, %7, %8 : vector<64x32xf32>
    %cst_6 = arith.constant 0.000000e+00 : f32
    %10 = vector.broadcast %cst_6 : f32 to vector<64x32xf32>
    %11 = arith.minimumf %7, %10 : vector<64x32xf32>
    %12 = math.exp %11 : vector<64x32xf32>
    %cst_7 = arith.constant 1.000000e+00 : f32
    %13 = vector.broadcast %cst_7 : f32 to vector<64x32xf32>
    %14 = arith.subf %12, %13 : vector<64x32xf32>
    %15 = arith.select %9, %7, %14 : vector<64x32xi1>, vector<64x32xf32>
    %cst_8 = arith.constant 0.000000e+00 : f32
    %16 = vector.broadcast %cst_8 : f32 to vector<24x32xf32>
    %cst_9 = arith.constant 0.000000e+00 : f32
    %17 = vector.broadcast %cst_9 : f32 to vector<8x8x32xf32>
    %c0_10 = arith.constant 0 : index
    %c0_11 = arith.constant 0 : index
    %c0_12 = arith.constant 0 : index
    %18 = vector.load %arg7[%c0_10, %c0_11, %c0_12] : memref<10x24x32xf32, #tpu.memory_space<vmem>>, vector<1x24x32xf32>
    %19 = vector.shape_cast %18 : vector<1x24x32xf32> to vector<24x32xf32>
    %20 = vector.shape_cast %16 : vector<24x32xf32> to vector<1x24x32xf32>
    tpu.vector_store %arg7[%c0_10, %c0_11, %c0_12], %20 {strides = array<i32>} : memref<10x24x32xf32, #tpu.memory_space<vmem>>, vector<1x24x32xf32>,
    %c9 = arith.constant 9 : index
    %c0_13 = arith.constant 0 : index
    %c0_14 = arith.constant 0 : index
    %21 = vector.load %arg7[%c9, %c0_13, %c0_14] : memref<10x24x32xf32, #tpu.memory_space<vmem>>, vector<1x24x32xf32>
    %22 = vector.shape_cast %21 : vector<1x24x32xf32> to vector<24x32xf32>
    %23 = vector.shape_cast %16 : vector<24x32xf32> to vector<1x24x32xf32>
    tpu.vector_store %arg7[%c9, %c0_13, %c0_14], %23 {strides = array<i32>} : memref<10x24x32xf32, #tpu.memory_space<vmem>>, vector<1x24x32xf32>,
    %c1 = arith.constant 1 : index
    %c0_15 = arith.constant 0 : index
    %c0_16 = arith.constant 0 : index
    %24 = vector.load %arg7[%c1, %c0_15, %c0_16] : memref<10x24x32xf32, #tpu.memory_space<vmem>>, vector<8x8x32xf32>
    tpu.vector_store %arg7[%c1, %c0_15, %c0_16], %17 {strides = array<i32>} : memref<10x24x32xf32, #tpu.memory_space<vmem>>, vector<8x8x32xf32>,
    %c1_17 = arith.constant 1 : index
    %c16 = arith.constant 16 : index
    %c0_18 = arith.constant 0 : index
    %25 = vector.load %arg7[%c1_17, %c16, %c0_18] : memref<10x24x32xf32, #tpu.memory_space<vmem>>, vector<8x8x32xf32>
    tpu.vector_store %arg7[%c1_17, %c16, %c0_18], %17 {strides = array<i32>} : memref<10x24x32xf32, #tpu.memory_space<vmem>>, vector<8x8x32xf32>,
    %26 = vector.shape_cast %15 : vector<64x32xf32> to vector<8x8x32xf32>
    %c1_19 = arith.constant 1 : index
    %c8 = arith.constant 8 : index
    %c0_20 = arith.constant 0 : index
    %27 = vector.load %arg7[%c1_19, %c8, %c0_20] : memref<10x24x32xf32, #tpu.memory_space<vmem>>, vector<8x8x32xf32>
    tpu.vector_store %arg7[%c1_19, %c8, %c0_20], %26 {strides = array<i32>} : memref<10x24x32xf32, #tpu.memory_space<vmem>>, vector<8x8x32xf32>,
    %c0_21 = arith.constant 0 : index
    %c0_22 = arith.constant 0 : index
    %28 = vector.load %arg5[%c0_21, %c0_22] : memref<1x128xf32, #tpu.memory_space<vmem>>, vector<1x128xf32>
    %29 = vector.shape_cast %28 : vector<1x128xf32> to vector<1x128xf32>
    %30 = vector.broadcast %29 : vector<1x128xf32> to vector<64x128xf32>
    %c0_23 = arith.constant 0 : index
    %c7 = arith.constant 7 : index
    %c0_24 = arith.constant 0 : index
    %31 = vector.load %arg7[%c0_23, %c7, %c0_24] : memref<10x24x32xf32, #tpu.memory_space<vmem>>, vector<8x8x32xf32>
    %32 = vector.shape_cast %31 : vector<8x8x32xf32> to vector<64x32xf32>
    %c0_25 = arith.constant 0 : index
    %c0_26 = arith.constant 0 : index
    %c0_27 = arith.constant 0 : index
    %33 = vector.load %arg4[%c0_25, %c0_26, %c0_27] : memref<9x32x128xf32, #tpu.memory_space<vmem>>, vector<1x32x128xf32>
    %34 = vector.shape_cast %33 : vector<1x32x128xf32> to vector<32x128xf32>
    %cst_28 = arith.constant dense<0.000000e+00> : vector<64x128xf32>
    %35 = tpu.matmul %32, %34, %cst_28 {dimension_numbers = #tpu.dot_dimension_numbers<[1], [0], [0], [1], [0, 0, 1, 1], [], []>} : vector<64x32xf32>, vector<32x128xf32>, vector<64x128xf32> -> vector<64x128xf32>
    %36 = arith.addf %30, %35 : vector<64x128xf32>
    %c0_29 = arith.constant 0 : index
    %c8_30 = arith.constant 8 : index
    %c0_31 = arith.constant 0 : index
    %37 = vector.load %arg7[%c0_29, %c8_30, %c0_31] : memref<10x24x32xf32, #tpu.memory_space<vmem>>, vector<8x8x32xf32>
    %38 = vector.shape_cast %37 : vector<8x8x32xf32> to vector<64x32xf32>
    %c1_32 = arith.constant 1 : index
    %c0_33 = arith.constant 0 : index
    %c0_34 = arith.constant 0 : index
    %39 = vector.load %arg4[%c1_32, %c0_33, %c0_34] : memref<9x32x128xf32, #tpu.memory_space<vmem>>, vector<1x32x128xf32>
    %40 = vector.shape_cast %39 : vector<1x32x128xf32> to vector<32x128xf32>
    %cst_35 = arith.constant dense<0.000000e+00> : vector<64x128xf32>
    %41 = tpu.matmul %38, %40, %cst_35 {dimension_numbers = #tpu.dot_dimension_numbers<[1], [0], [0], [1], [0, 0, 1, 1], [], []>} : vector<64x32xf32>, vector<32x128xf32>, vector<64x128xf32> -> vector<64x128xf32>
    %42 = arith.addf %36, %41 : vector<64x128xf32>
    %c0_36 = arith.constant 0 : index
    %c9_37 = arith.constant 9 : index
    %c0_38 = arith.constant 0 : index
    %43 = vector.load %arg7[%c0_36, %c9_37, %c0_38] : memref<10x24x32xf32, #tpu.memory_space<vmem>>, vector<8x8x32xf32>
    %44 = vector.shape_cast %43 : vector<8x8x32xf32> to vector<64x32xf32>
    %c2 = arith.constant 2 : index
    %c0_39 = arith.constant 0 : index
    %c0_40 = arith.constant 0 : index
    %45 = vector.load %arg4[%c2, %c0_39, %c0_40] : memref<9x32x128xf32, #tpu.memory_space<vmem>>, vector<1x32x128xf32>
    %46 = vector.shape_cast %45 : vector<1x32x128xf32> to vector<32x128xf32>
    %cst_41 = arith.constant dense<0.000000e+00> : vector<64x128xf32>
    %47 = tpu.matmul %44, %46, %cst_41 {dimension_numbers = #tpu.dot_dimension_numbers<[1], [0], [0], [1], [0, 0, 1, 1], [], []>} : vector<64x32xf32>, vector<32x128xf32>, vector<64x128xf32> -> vector<64x128xf32>
    %48 = arith.addf %42, %47 : vector<64x128xf32>
    %c1_42 = arith.constant 1 : index
    %c7_43 = arith.constant 7 : index
    %c0_44 = arith.constant 0 : index
    %49 = vector.load %arg7[%c1_42, %c7_43, %c0_44] : memref<10x24x32xf32, #tpu.memory_space<vmem>>, vector<8x8x32xf32>
    %50 = vector.shape_cast %49 : vector<8x8x32xf32> to vector<64x32xf32>
    %c3 = arith.constant 3 : index
    %c0_45 = arith.constant 0 : index
    %c0_46 = arith.constant 0 : index
    %51 = vector.load %arg4[%c3, %c0_45, %c0_46] : memref<9x32x128xf32, #tpu.memory_space<vmem>>, vector<1x32x128xf32>
    %52 = vector.shape_cast %51 : vector<1x32x128xf32> to vector<32x128xf32>
    %cst_47 = arith.constant dense<0.000000e+00> : vector<64x128xf32>
    %53 = tpu.matmul %50, %52, %cst_47 {dimension_numbers = #tpu.dot_dimension_numbers<[1], [0], [0], [1], [0, 0, 1, 1], [], []>} : vector<64x32xf32>, vector<32x128xf32>, vector<64x128xf32> -> vector<64x128xf32>
    %54 = arith.addf %48, %53 : vector<64x128xf32>
    %c1_48 = arith.constant 1 : index
    %c8_49 = arith.constant 8 : index
    %c0_50 = arith.constant 0 : index
    %55 = vector.load %arg7[%c1_48, %c8_49, %c0_50] : memref<10x24x32xf32, #tpu.memory_space<vmem>>, vector<8x8x32xf32>
    %56 = vector.shape_cast %55 : vector<8x8x32xf32> to vector<64x32xf32>
    %c4 = arith.constant 4 : index
    %c0_51 = arith.constant 0 : index
    %c0_52 = arith.constant 0 : index
    %57 = vector.load %arg4[%c4, %c0_51, %c0_52] : memref<9x32x128xf32, #tpu.memory_space<vmem>>, vector<1x32x128xf32>
    %58 = vector.shape_cast %57 : vector<1x32x128xf32> to vector<32x128xf32>
    %cst_53 = arith.constant dense<0.000000e+00> : vector<64x128xf32>
    %59 = tpu.matmul %56, %58, %cst_53 {dimension_numbers = #tpu.dot_dimension_numbers<[1], [0], [0], [1], [0, 0, 1, 1], [], []>} : vector<64x32xf32>, vector<32x128xf32>, vector<64x128xf32> -> vector<64x128xf32>
    %60 = arith.addf %54, %59 : vector<64x128xf32>
    %c1_54 = arith.constant 1 : index
    %c9_55 = arith.constant 9 : index
    %c0_56 = arith.constant 0 : index
    %61 = vector.load %arg7[%c1_54, %c9_55, %c0_56] : memref<10x24x32xf32, #tpu.memory_space<vmem>>, vector<8x8x32xf32>
    %62 = vector.shape_cast %61 : vector<8x8x32xf32> to vector<64x32xf32>
    %c5 = arith.constant 5 : index
    %c0_57 = arith.constant 0 : index
    %c0_58 = arith.constant 0 : index
    %63 = vector.load %arg4[%c5, %c0_57, %c0_58] : memref<9x32x128xf32, #tpu.memory_space<vmem>>, vector<1x32x128xf32>
    %64 = vector.shape_cast %63 : vector<1x32x128xf32> to vector<32x128xf32>
    %cst_59 = arith.constant dense<0.000000e+00> : vector<64x128xf32>
    %65 = tpu.matmul %62, %64, %cst_59 {dimension_numbers = #tpu.dot_dimension_numbers<[1], [0], [0], [1], [0, 0, 1, 1], [], []>} : vector<64x32xf32>, vector<32x128xf32>, vector<64x128xf32> -> vector<64x128xf32>
    %66 = arith.addf %60, %65 : vector<64x128xf32>
    %c2_60 = arith.constant 2 : index
    %c7_61 = arith.constant 7 : index
    %c0_62 = arith.constant 0 : index
    %67 = vector.load %arg7[%c2_60, %c7_61, %c0_62] : memref<10x24x32xf32, #tpu.memory_space<vmem>>, vector<8x8x32xf32>
    %68 = vector.shape_cast %67 : vector<8x8x32xf32> to vector<64x32xf32>
    %c6 = arith.constant 6 : index
    %c0_63 = arith.constant 0 : index
    %c0_64 = arith.constant 0 : index
    %69 = vector.load %arg4[%c6, %c0_63, %c0_64] : memref<9x32x128xf32, #tpu.memory_space<vmem>>, vector<1x32x128xf32>
    %70 = vector.shape_cast %69 : vector<1x32x128xf32> to vector<32x128xf32>
    %cst_65 = arith.constant dense<0.000000e+00> : vector<64x128xf32>
    %71 = tpu.matmul %68, %70, %cst_65 {dimension_numbers = #tpu.dot_dimension_numbers<[1], [0], [0], [1], [0, 0, 1, 1], [], []>} : vector<64x32xf32>, vector<32x128xf32>, vector<64x128xf32> -> vector<64x128xf32>
    %72 = arith.addf %66, %71 : vector<64x128xf32>
    %c2_66 = arith.constant 2 : index
    %c8_67 = arith.constant 8 : index
    %c0_68 = arith.constant 0 : index
    %73 = vector.load %arg7[%c2_66, %c8_67, %c0_68] : memref<10x24x32xf32, #tpu.memory_space<vmem>>, vector<8x8x32xf32>
    %74 = vector.shape_cast %73 : vector<8x8x32xf32> to vector<64x32xf32>
    %c7_69 = arith.constant 7 : index
    %c0_70 = arith.constant 0 : index
    %c0_71 = arith.constant 0 : index
    %75 = vector.load %arg4[%c7_69, %c0_70, %c0_71] : memref<9x32x128xf32, #tpu.memory_space<vmem>>, vector<1x32x128xf32>
    %76 = vector.shape_cast %75 : vector<1x32x128xf32> to vector<32x128xf32>
    %cst_72 = arith.constant dense<0.000000e+00> : vector<64x128xf32>
    %77 = tpu.matmul %74, %76, %cst_72 {dimension_numbers = #tpu.dot_dimension_numbers<[1], [0], [0], [1], [0, 0, 1, 1], [], []>} : vector<64x32xf32>, vector<32x128xf32>, vector<64x128xf32> -> vector<64x128xf32>
    %78 = arith.addf %72, %77 : vector<64x128xf32>
    %c2_73 = arith.constant 2 : index
    %c9_74 = arith.constant 9 : index
    %c0_75 = arith.constant 0 : index
    %79 = vector.load %arg7[%c2_73, %c9_74, %c0_75] : memref<10x24x32xf32, #tpu.memory_space<vmem>>, vector<8x8x32xf32>
    %80 = vector.shape_cast %79 : vector<8x8x32xf32> to vector<64x32xf32>
    %c8_76 = arith.constant 8 : index
    %c0_77 = arith.constant 0 : index
    %c0_78 = arith.constant 0 : index
    %81 = vector.load %arg4[%c8_76, %c0_77, %c0_78] : memref<9x32x128xf32, #tpu.memory_space<vmem>>, vector<1x32x128xf32>
    %82 = vector.shape_cast %81 : vector<1x32x128xf32> to vector<32x128xf32>
    %cst_79 = arith.constant dense<0.000000e+00> : vector<64x128xf32>
    %83 = tpu.matmul %80, %82, %cst_79 {dimension_numbers = #tpu.dot_dimension_numbers<[1], [0], [0], [1], [0, 0, 1, 1], [], []>} : vector<64x32xf32>, vector<32x128xf32>, vector<64x128xf32> -> vector<64x128xf32>
    %84 = arith.addf %78, %83 : vector<64x128xf32>
    %c0_80 = arith.constant 0 : index
    %c0_81 = arith.constant 0 : index
    %c0_82 = arith.constant 0 : index
    %85 = vector.load %arg6[%c0_80, %c0_81, %c0_82] : memref<1x64x128xf32, #tpu.memory_space<vmem>>, vector<1x64x128xf32>
    %86 = vector.shape_cast %85 : vector<1x64x128xf32> to vector<64x128xf32>
    %87 = vector.shape_cast %84 : vector<64x128xf32> to vector<1x64x128xf32>
    tpu.vector_store %arg6[%c0_80, %c0_81, %c0_82], %87 {strides = array<i32>} : memref<1x64x128xf32, #tpu.memory_space<vmem>>, vector<1x64x128xf32>,
    return
  }
  func.func @transform_0(%arg0: i32) -> (i32, i32, i32) {
    %c0_i32 = arith.constant 0 : i32
    %c0_i32_0 = arith.constant 0 : i32
    %c0_i32_1 = arith.constant 0 : i32
    return %arg0, %c0_i32, %c0_i32_0 : i32, i32, i32
  }
  func.func @transform_1(%arg0: i32) -> (i32, i32) {
    %c0_i32 = arith.constant 0 : i32
    %c0_i32_0 = arith.constant 0 : i32
    %c0_i32_1 = arith.constant 0 : i32
    return %c0_i32, %c0_i32_0 : i32, i32
  }
  func.func @transform_2(%arg0: i32) -> (i32, i32) {
    %c0_i32 = arith.constant 0 : i32
    %c0_i32_0 = arith.constant 0 : i32
    %c0_i32_1 = arith.constant 0 : i32
    return %c0_i32, %c0_i32_0 : i32, i32
  }
  func.func @transform_3(%arg0: i32) -> (i32, i32, i32) {
    %c0_i32 = arith.constant 0 : i32
    %c0_i32_0 = arith.constant 0 : i32
    %c0_i32_1 = arith.constant 0 : i32
    %c0_i32_2 = arith.constant 0 : i32
    return %c0_i32, %c0_i32_0, %c0_i32_1 : i32, i32, i32
  }
  func.func @transform_4(%arg0: i32) -> (i32, i32) {
    %c0_i32 = arith.constant 0 : i32
    %c0_i32_0 = arith.constant 0 : i32
    %c0_i32_1 = arith.constant 0 : i32
    return %c0_i32, %c0_i32_0 : i32, i32
  }
  func.func @transform_5(%arg0: i32) -> (i32, i32, i32) {
    %c0_i32 = arith.constant 0 : i32
    %c0_i32_0 = arith.constant 0 : i32
    %c0_i32_1 = arith.constant 0 : i32
    return %arg0, %c0_i32, %c0_i32_0 : i32, i32, i32
  }
}

</mosaic_0001>

<llo_original>
// kernel: tile.18
$region0: #{tile.18}
  #allocation0 [shape = 's32[1]{0}', space=sflag, size = 0x4, scoped, tag = 'scoped memory for tile.18']
  %s0 = inlined_call_operand.vmem [shape: f32[4], index: 0, kind: input, shape index: {}]
  %s1 = inlined_call_operand.vmem [shape: f32[8,4], index: 1, kind: output, shape index: {}]
  // Predicated region
  $region2: #{tile.18} parent=0 // pred_check
    _
  $region3: #{tile.18} parent=0 // pred_check_branch
    %3 = sbr.rel (0) target = $region5
  $region4: #{tile.18} parent=0 // pred_region
    _
  $region5: #{tile.18} parent=0 // pred_fallthru
    _
  %v4 = vld [vmem:[%s0] ss:$0 sm:$0xff]
  %5 = vst [vmem:[%s1] sm:$0xff] %v4

// kernel: tile.19
$region0: #{tile.19}
  %s0 = inlined_call_operand.vmem [shape: f32[8,4], index: 0, kind: input, shape index: {}]
  %s1 = inlined_call_operand.vmem [shape: f32[1,32], index: 1, kind: output, shape index: {}]
  $region1: #{tile.19} parent=0
    #allocation0 [shape = 'u8[4096]{0}', space=vmem, size = 0x1000, scoped, tag = 'scoped mem for output reshape']
    %v2 = vld [vmem:[%s0] sm:$0x1]
    %vm3 = vcmask 31744
    %4 = vst.msk [vmem:[#allocation0] sm:$0x1] %vm3, %v2
    %s5 = scalar_lea.vmem %s0, 7
    %v6 = vld [vmem:[%s5] sm:$0x1]
    %7 = vrot.lane.b32.xlu0 %v6, 28
    %v8 = vpop.permute.xlu0 %7
    %vm9 = vcmask 261344
    %10 = vst.msk [vmem:[#allocation0] sm:$0x1] %vm9, %v8
    %s11 = scalar_lea.vmem %s0, 6
    %v12 = vld [vmem:[%s11] sm:$0x1]
    %13 = vrot.lane.b32.xlu0 %v12, 24
    %v14 = vpop.permute.xlu0 %13
    %vm15 = vcmask 228544
    %16 = vst.msk [vmem:[#allocation0] sm:$0x1] %vm15, %v14
    %s17 = scalar_lea.vmem %s0, 5
    %v18 = vld [vmem:[%s17] sm:$0x1]
    %19 = vrot.lane.b32.xlu0 %v18, 20
    %v20 = vpop.permute.xlu0 %19
    %vm21 = vcmask 195744
    %22 = vst.msk [vmem:[#allocation0] sm:$0x1] %vm21, %v20
    %s23 = scalar_lea.vmem %s0, 4
    %v24 = vld [vmem:[%s23] sm:$0x1]
    %25 = vrot.lane.b32.xlu0 %v24, 16
    %v26 = vpop.permute.xlu0 %25
    %vm27 = vcmask 162944
    %28 = vst.msk [vmem:[#allocation0] sm:$0x1] %vm27, %v26
    %s29 = scalar_lea.vmem %s0, 3
    %v30 = vld [vmem:[%s29] sm:$0x1]
    %31 = vrot.lane.b32.xlu0 %v30, 12
    %v32 = vpop.permute.xlu0 %31
    %vm33 = vcmask 130144
    %34 = vst.msk [vmem:[#allocation0] sm:$0x1] %vm33, %v32
    %s35 = scalar_lea.vmem %s0, 2
    %v36 = vld [vmem:[%s35] sm:$0x1]
    %37 = vrot.lane.b32.xlu0 %v36, 8
    %v38 = vpop.permute.xlu0 %37
    %vm39 = vcmask 97344
    %40 = vst.msk [vmem:[#allocation0] sm:$0x1] %vm39, %v38
    %s41 = scalar_lea.vmem %s0, 1
    %v42 = vld [vmem:[%s41] sm:$0x1]
    %43 = vrot.lane.b32.xlu0 %v42, 4
    %v44 = vpop.permute.xlu0 %43
    %vm45 = vcmask 64544
    %46 = vst.msk [vmem:[#allocation0] sm:$0x1] %vm45, %v44
    %s48 = sshll.u32 1, 1
    %s49 = ssub.s32 %s48, 1
    %v51 = vld [vmem:[#allocation0] sm:%s49]
    %s52 = sshll.u32 1, 1
    %s53 = ssub.s32 %s52, 1
    %54 = vst [vmem:[%s1] sm:%s53] %v51

// kernel: dense_unit_forward.1
$region0: #{dense_unit_forward.1}
  #allocation0 [shape = 'u32[]', space=smem, size = 0x4, offset = 0x4, fixed_abs, tag = 'smem constant byte address 0x4 - core index']
  #allocation1 [shape = 'u32[144,128]{1,0:T(1,128)}', space=vmem, size = 0x12000, scoped, tag = 'internal scratch']
  #allocation2 [shape = 'f32[10,24,32]{2,1,0:T(8,128)}', space=vmem, size = 0x1e000, scoped, tag = 'scratch operand']
  %s0 = inlined_call_operand.vmem [shape: f32[2,64,32], index: 0, kind: input, shape index: {}]
  %s1 = inlined_call_operand.vmem [shape: f32[1,32], index: 1, kind: input, shape index: {}]
  %s2 = inlined_call_operand.vmem [shape: f32[1,32], index: 2, kind: input, shape index: {}]
  %s3 = inlined_call_operand.vmem [shape: f32[9,32,128], index: 3, kind: input, shape index: {}]
  %s4 = inlined_call_operand.vmem [shape: f32[1,128], index: 4, kind: input, shape index: {}]
  %s5 = inlined_call_operand.vmem [shape: f32[2,64,128], index: 5, kind: output, shape index: {}]
  %s6 = sld [smem:[#allocation0]]
  $region53: #{dense_unit_forward.1} parent=0
    _
  %s8 = ssub.s32 1, %s6
  %s9 = scalar_select 0, %s8, %s6
  loop: start=0, step=1, limit=4
  $region2: #{dense_unit_forward.1} parent=0 // loop_pre_header
    _
  $region3: #{dense_unit_forward.1} parent=0 // loop_header
    %s11 = sphi 0, %s15
    %p12 = scmp.ge.s32.totalorder %s11, 4
    %s21 = sphi 0, %s23
    %s24 = sphi 0, %s21
    %s25 = sphi 0, %s24
    %s41 = sphi 0, %s25
    %s45 = sphi 0, %s45
    %s47 = sphi 0, %s45
    %s48 = sphi 0, %s47
    %s62 = sphi 0, %s48
    %s66 = sphi 0, %s66
    %s68 = sphi 0, %s66
    %s69 = sphi 0, %s68
    %s83 = sphi 0, %s69
    %s87 = sphi 0, %s87
    %s89 = sphi 0, %s87
    %s90 = sphi 0, %s89
    %s104 = sphi 0, %s90
    %s108 = sphi 0, %s108
    %s110 = sphi 0, %s108
    %s111 = sphi 0, %s110
    %s125 = sphi 0, %s111
    %s131 = sphi 0, %s133
    %s134 = sphi 0, %s131
    %s135 = sphi 0, %s134
    %s151 = sphi 0, %s135
  $region4: #{dense_unit_forward.1} parent=0 // loop_header_branch
    %14 = sbr.rel (%p12) target = $region8
  $region5: #{dense_unit_forward.1} parent=0 // loop_body
    %s16 = ssub.s32 %s11, 1
    %s17 = ssub.s32 %s11, 2
    %s18 = sadd.s32 %s11, 1
    %s19 = ssub.s32 %s11, %s18
    %p20 = scmp.eq.s32.totalorder %s19, 0
    %s22 = sadd.s32 %s21, 1
    %s23 = scalar_select %p20, %s21, %s22
    %p26 = pneg %p20
    %p27 = scmp.eq.s32.totalorder %s11, 1
    %p28 = por %p26, %p27
    %p29 = scmp.ne.s32.totalorder %s21, %s24
    %p30 = scmp.eq.s32.totalorder %s11, 0
    %p31 = por %p29, %p30
    %p32 = scmp.ne.s32.totalorder %s21, %s24
    %p33 = scmp.eq.s32.totalorder %s16, 1
    %p34 = por %p32, %p33
    %p35 = scmp.ne.s32.totalorder %s24, %s25
    %p36 = scmp.eq.s32.totalorder %s16, 0
    %p37 = por %p35, %p36
    %p38 = scmp.ne.s32.totalorder %s24, %s25
    %p39 = scmp.eq.s32.totalorder %s17, 1
    %p40 = por %p38, %p39
    %p42 = scmp.ne.s32.totalorder %s25, %s41
    %p43 = scmp.eq.s32.totalorder %s17, 0
    %p44 = por %p42, %p43
    %s46 = sadd.s32 %s45, 1
    %p49 = scmp.eq.s32.totalorder %s11, 1
    %p50 = scmp.ne.s32.totalorder %s45, %s47
    %p51 = scmp.eq.s32.totalorder %s11, 0
    %p52 = por %p50, %p51
    %p53 = scmp.ne.s32.totalorder %s45, %s47
    %p54 = scmp.eq.s32.totalorder %s16, 1
    %p55 = por %p53, %p54
    %p56 = scmp.ne.s32.totalorder %s47, %s48
    %p57 = scmp.eq.s32.totalorder %s16, 0
    %p58 = por %p56, %p57
    %p59 = scmp.ne.s32.totalorder %s47, %s48
    %p60 = scmp.eq.s32.totalorder %s17, 1
    %p61 = por %p59, %p60
    %p63 = scmp.ne.s32.totalorder %s48, %s62
    %p64 = scmp.eq.s32.totalorder %s17, 0
    %p65 = por %p63, %p64
    %s67 = sadd.s32 %s66, 1
    %p70 = scmp.eq.s32.totalorder %s11, 1
    %p71 = scmp.ne.s32.totalorder %s66, %s68
    %p72 = scmp.eq.s32.totalorder %s11, 0
    %p73 = por %p71, %p72
    %p74 = scmp.ne.s32.totalorder %s66, %s68
    %p75 = scmp.eq.s32.totalorder %s16, 1
    %p76 = por %p74, %p75
    %p77 = scmp.ne.s32.totalorder %s68, %s69
    %p78 = scmp.eq.s32.totalorder %s16, 0
    %p79 = por %p77, %p78
    %p80 = scmp.ne.s32.totalorder %s68, %s69
    %p81 = scmp.eq.s32.totalorder %s17, 1
    %p82 = por %p80, %p81
    %p84 = scmp.ne.s32.totalorder %s69, %s83
    %p85 = scmp.eq.s32.totalorder %s17, 0
    %p86 = por %p84, %p85
    %s88 = sadd.s32 %s87, 1
    %p91 = scmp.eq.s32.totalorder %s11, 1
    %p92 = scmp.ne.s32.totalorder %s87, %s89
    %p93 = scmp.eq.s32.totalorder %s11, 0
    %p94 = por %p92, %p93
    %p95 = scmp.ne.s32.totalorder %s87, %s89
    %p96 = scmp.eq.s32.totalorder %s16, 1
    %p97 = por %p95, %p96
    %p98 = scmp.ne.s32.totalorder %s89, %s90
    %p99 = scmp.eq.s32.totalorder %s16, 0
    %p100 = por %p98, %p99
    %p101 = scmp.ne.s32.totalorder %s89, %s90
    %p102 = scmp.eq.s32.totalorder %s17, 1
    %p103 = por %p101, %p102
    %p105 = scmp.ne.s32.totalorder %s90, %s104
    %p106 = scmp.eq.s32.totalorder %s17, 0
    %p107 = por %p105, %p106
    %s109 = sadd.s32 %s108, 1
    %p112 = scmp.eq.s32.totalorder %s11, 1
    %p113 = scmp.ne.s32.totalorder %s108, %s110
    %p114 = scmp.eq.s32.totalorder %s11, 0
    %p115 = por %p113, %p114
    %p116 = scmp.ne.s32.totalorder %s108, %s110
    %p117 = scmp.eq.s32.totalorder %s16, 1
    %p118 = por %p116, %p117
    %p119 = scmp.ne.s32.totalorder %s110, %s111
    %p120 = scmp.eq.s32.totalorder %s16, 0
    %p121 = por %p119, %p120
    %p122 = scmp.ne.s32.totalorder %s110, %s111
    %p123 = scmp.eq.s32.totalorder %s17, 1
    %p124 = por %p122, %p123
    %p126 = scmp.ne.s32.totalorder %s111, %s125
    %p127 = scmp.eq.s32.totalorder %s17, 0
    %p128 = por %p126, %p127
    %s129 = ssub.s32 %s11, %s18
    %p130 = scmp.eq.s32.totalorder %s129, 0
    %s132 = sadd.s32 %s131, 1
    %s133 = scalar_select %p130, %s131, %s132
    %p136 = pneg %p130
    %p137 = scmp.eq.s32.totalorder %s11, 1
    %p138 = por %p136, %p137
    %p139 = scmp.ne.s32.totalorder %s131, %s134
    %p140 = scmp.eq.s32.totalorder %s11, 0
    %p141 = por %p139, %p140
    %p142 = scmp.ne.s32.totalorder %s131, %s134
    %p143 = scmp.eq.s32.totalorder %s16, 1
    %p144 = por %p142, %p143
    %p145 = scmp.ne.s32.totalorder %s134, %s135
    %p146 = scmp.eq.s32.totalorder %s16, 0
    %p147 = por %p145, %p146
    %p148 = scmp.ne.s32.totalorder %s134, %s135
    %p149 = scmp.eq.s32.totalorder %s17, 1
    %p150 = por %p148, %p149
    %p152 = scmp.ne.s32.totalorder %s135, %s151
    %p153 = scmp.eq.s32.totalorder %s17, 0
    %p154 = por %p152, %p153
    %p155 = scmp.le.s32.totalorder 1, %s11
    %p156 = scmp.lt.s32.totalorder %s11, 3
    %p157 = pnand %p155, %p156
    %p158 = pneg %p157
    // Predicated region
    $region9: #{dense_unit_forward.1} parent=5 // pred_check
      _
    $region10: #{dense_unit_forward.1} parent=5 // pred_check_branch
      %160 = sbr.rel (%p157) target = $region12
    $region11: #{dense_unit_forward.1} parent=5 // pred_region
      %s161 = ssub.s32 %s11, 1
      // Predicated region
      $region13: #{dense_unit_forward.1} parent=11 // pred_check
        %p162 = pneg %p58
      $region14: #{dense_unit_forward.1} parent=11 // pred_check_branch
        %164 = sbr.rel (%p162) target = $region16
      $region15: #{dense_unit_forward.1} parent=11 // pred_region
        _
      $region16: #{dense_unit_forward.1} parent=11 // pred_fallthru
        _
      // Predicated region
      $region17: #{dense_unit_forward.1} parent=11 // pred_check
        %p165 = pneg %p79
      $region18: #{dense_unit_forward.1} parent=11 // pred_check_branch
        %167 = sbr.rel (%p165) target = $region20
      $region19: #{dense_unit_forward.1} parent=11 // pred_region
        _
      $region20: #{dense_unit_forward.1} parent=11 // pred_fallthru
        _
      // Predicated region
      $region21: #{dense_unit_forward.1} parent=11 // pred_check
        %p168 = pneg %p100
      $region22: #{dense_unit_forward.1} parent=11 // pred_check_branch
        %170 = sbr.rel (%p168) target = $region24
      $region23: #{dense_unit_forward.1} parent=11 // pred_region
        _
      $region24: #{dense_unit_forward.1} parent=11 // pred_fallthru
        _
      // Predicated region
      $region25: #{dense_unit_forward.1} parent=11 // pred_check
        %p171 = pneg %p121
      $region26: #{dense_unit_forward.1} parent=11 // pred_check_branch
        %173 = sbr.rel (%p171) target = $region28
      $region27: #{dense_unit_forward.1} parent=11 // pred_region
        _
      $region28: #{dense_unit_forward.1} parent=11 // pred_fallthru
        _
    $region12: #{dense_unit_forward.1} parent=5 // pred_fallthru
      _
    %p174 = scmp.lt.s32.totalorder %s11, 2
    // Predicated region
    $region29: #{dense_unit_forward.1} parent=5 // pred_check
      %p175 = pneg %p174
    $region30: #{dense_unit_forward.1} parent=5 // pred_check_branch
      %177 = sbr.rel (%p175) target = $region32
    $region31: #{dense_unit_forward.1} parent=5 // pred_region
      // Predicated region
      $region33: #{dense_unit_forward.1} parent=31 // pred_check
        %p178 = pneg %p31
      $region34: #{dense_unit_forward.1} parent=31 // pred_check_branch
        %180 = sbr.rel (%p178) target = $region36
      $region35: #{dense_unit_forward.1} parent=31 // pred_region
        %p181 = scmp.lt.s32.totalorder %s11, 1
        %s182 = scalar_select %p181, %s11, 1
        %s183 = smul.addr %s182, 8
        %s184 = smul.addr %s183, 8
        %s185 = scalar_lea.vmem %s0, %s184
      $region36: #{dense_unit_forward.1} parent=31 // pred_fallthru
        _
    $region32: #{dense_unit_forward.1} parent=5 // pred_fallthru
      _
    %p186 = scmp.le.s32.totalorder 1, %s11
    %p187 = scmp.lt.s32.totalorder %s11, 3
    %p188 = pnand %p186, %p187
    %p189 = pneg %p188
    // Predicated region
    $region37: #{dense_unit_forward.1} parent=5 // pred_check
      _
    $region38: #{dense_unit_forward.1} parent=5 // pred_check_branch
      %191 = sbr.rel (%p188) target = $region40
    $region39: #{dense_unit_forward.1} parent=5 // pred_region
      %s192 = ssub.s32 %s11, 1
      %p193 = scmp.lt.s32.totalorder %s16, 1
      %s194 = scalar_select %p193, %s16, 1
      %s195 = smul.addr %s194, 8
      %s196 = smul.addr %s195, 8
      %s197 = scalar_lea.vmem %s0, %s196
      %p198 = pneg %p37
      %p199 = pneg %p34
      %p200 = pneg %p58
      %p201 = pneg %p55
      %p202 = pneg %p79
      %p203 = pneg %p76
      %p204 = pneg %p100
      %p205 = pneg %p97
      %p206 = pneg %p121
      %p207 = pneg %p118
      %p208 = pneg %p147
      %p209 = pneg %p144
      %p210 = scmp.lt.s32.totalorder %s16, 1
      %s211 = scalar_select %p210, %s16, 1
      %s212 = smul.addr %s211, 8
      %s213 = smul.addr %s212, 8
      %s214 = scalar_lea.vmem %s5, %s213
      %p215 = scmp.lt.s32.totalorder %s16, 1
      %s216 = scalar_select %p215, %s16, 1
      %s217 = smul.addr %s216, 8
      %s218 = smul.addr %s217, 8
      %s219 = scalar_lea.vmem %s0, %s218
      %p220 = scmp.lt.s32.totalorder %s16, 1
      %s221 = scalar_select %p220, %s16, 1
      %s222 = smul.addr %s221, 8
      %s223 = smul.addr %s222, 8
      %s224 = scalar_lea.vmem %s5, %s223
      %v225 = vld [vmem:[%s219] sm:$0xff]
      %v226 = vld [vmem:[%s219 + $0x8] sm:$0xff]
      %v227 = vld [vmem:[%s219 + $0x10] sm:$0xff]
      %v228 = vld [vmem:[%s219 + $0x18] sm:$0xff]
      %v229 = vld [vmem:[%s219 + $0x20] sm:$0xff]
      %v230 = vld [vmem:[%s219 + $0x28] sm:$0xff]
      %v231 = vld [vmem:[%s219 + $0x30] sm:$0xff]
      %v232 = vld [vmem:[%s219 + $0x38] sm:$0xff]
      %v233 = vld [vmem:[%s1] sm:$0x1]
      %v235 = vlaneseq
      %v236 = vshrl.u32 %v235, 7
      %v237 = vsub.s32 0, %v236
      %v238 = vrot.slane %v233, %v237
      %v240 = vmul.f32 %v225, %v238
      %v241 = vmul.f32 %v226, %v238
      %v242 = vmul.f32 %v227, %v238
      %v243 = vmul.f32 %v228, %v238
      %v244 = vmul.f32 %v229, %v238
      %v245 = vmul.f32 %v230, %v238
      %v246 = vmul.f32 %v231, %v238
      %v247 = vmul.f32 %v232, %v238
      %v248 = vld [vmem:[%s2] sm:$0x1]
      %v250 = vlaneseq
      %v251 = vshrl.u32 %v250, 7
      %v252 = vsub.s32 0, %v251
      %v253 = vrot.slane %v248, %v252
      %v255 = vadd.f32 %v240, %v253
      %v256 = vadd.f32 %v241, %v253
      %v257 = vadd.f32 %v242, %v253
      %v258 = vadd.f32 %v243, %v253
      %v259 = vadd.f32 %v244, %v253
      %v260 = vadd.f32 %v245, %v253
      %v261 = vadd.f32 %v246, %v253
      %v262 = vadd.f32 %v247, %v253
      %vm263 = vcmp.gt.f32.partialorder %v255, 0.0
      %vm264 = vcmp.gt.f32.partialorder %v256, 0.0
      %vm265 = vcmp.gt.f32.partialorder %v257, 0.0
      %vm266 = vcmp.gt.f32.partialorder %v258, 0.0
      %vm267 = vcmp.gt.f32.partialorder %v259, 0.0
      %vm268 = vcmp.gt.f32.partialorder %v260, 0.0
      %vm269 = vcmp.gt.f32.partialorder %v261, 0.0
      %vm270 = vcmp.gt.f32.partialorder %v262, 0.0
      %v271 = vmin.f32 %v255, 0.0
      %v272 = vmin.f32 %v256, 0.0
      %v273 = vmin.f32 %v257, 0.0
      %v274 = vmin.f32 %v258, 0.0
      %v275 = vmin.f32 %v259, 0.0
      %v276 = vmin.f32 %v260, 0.0
      %v277 = vmin.f32 %v261, 0.0
      %v278 = vmin.f32 %v262, 0.0
      %v279 = vmul.f32 %v271, 1.442695
      %v280 = vpow.pop %v279
      %v281 = vmul.f32 %v272, 1.442695
      %v282 = vpow.pop %v281
      %v283 = vmul.f32 %v273, 1.442695
      %v284 = vpow.pop %v283
      %v285 = vmul.f32 %v274, 1.442695
      %v286 = vpow.pop %v285
      %v287 = vmul.f32 %v275, 1.442695
      %v288 = vpow.pop %v287
      %v289 = vmul.f32 %v276, 1.442695
      %v290 = vpow.pop %v289
      %v291 = vmul.f32 %v277, 1.442695
      %v292 = vpow.pop %v291
      %v293 = vmul.f32 %v278, 1.442695
      %v294 = vpow.pop %v293
      %v295 = vsub.f32 %v280, 1.0
      %v296 = vsub.f32 %v282, 1.0
      %v297 = vsub.f32 %v284, 1.0
      %v298 = vsub.f32 %v286, 1.0
      %v299 = vsub.f32 %v288, 1.0
      %v300 = vsub.f32 %v290, 1.0
      %v301 = vsub.f32 %v292, 1.0
      %v302 = vsub.f32 %v294, 1.0
      %v303 = vsel %vm263, %v255, %v295
      %v304 = vsel %vm264, %v256, %v296
      %v305 = vsel %vm265, %v257, %v297
      %v306 = vsel %vm266, %v258, %v298
      %v307 = vsel %vm267, %v259, %v299
      %v308 = vsel %vm268, %v260, %v300
      %v309 = vsel %vm269, %v261, %v301
      %v310 = vsel %vm270, %v262, %v302
      %vm311 = vcmask 261120
      %312 = vst.msk [vmem:[#allocation2] sm:$0xff] %vm311, 0.0
      %313 = vst.msk [vmem:[#allocation2 + $0x8] sm:$0xff] %vm311, 0.0
      %314 = vst.msk [vmem:[#allocation2 + $0x10] sm:$0xff] %vm311, 0.0
      %s315 = scalar_lea.vmem [#allocation2], 216
      %316 = vst.msk [vmem:[%s315] sm:$0xff] %vm311, 0.0
      %317 = vst.msk [vmem:[%s315 + $0x8] sm:$0xff] %vm311, 0.0
      %318 = vst.msk [vmem:[%s315 + $0x10] sm:$0xff] %vm311, 0.0
      %s319 = scalar_lea.vmem [#allocation2], 24
      %320 = vst.msk [vmem:[%s319] sm:$0xff] %vm311, 0.0
      %321 = vst.msk [vmem:[%s319 + $0x18] sm:$0xff] %vm311, 0.0
      %322 = vst.msk [vmem:[%s319 + $0x30] sm:$0xff] %vm311, 0.0
      %323 = vst.msk [vmem:[%s319 + $0x48] sm:$0xff] %vm311, 0.0
      %324 = vst.msk [vmem:[%s319 + $0x60] sm:$0xff] %vm311, 0.0
      %325 = vst.msk [vmem:[%s319 + $0x78] sm:$0xff] %vm311, 0.0
      %326 = vst.msk [vmem:[%s319 + $0x90] sm:$0xff] %vm311, 0.0
      %327 = vst.msk [vmem:[%s319 + $0xa8] sm:$0xff] %vm311, 0.0
      %328 = vst.msk [vmem:[%s319 + $0x10] sm:$0xff] %vm311, 0.0
      %329 = vst.msk [vmem:[%s319 + $0x28] sm:$0xff] %vm311, 0.0
      %330 = vst.msk [vmem:[%s319 + $0x40] sm:$0xff] %vm311, 0.0
      %331 = vst.msk [vmem:[%s319 + $0x58] sm:$0xff] %vm311, 0.0
      %332 = vst.msk [vmem:[%s319 + $0x70] sm:$0xff] %vm311, 0.0
      %333 = vst.msk [vmem:[%s319 + $0x88] sm:$0xff] %vm311, 0.0
      %334 = vst.msk [vmem:[%s319 + $0xa0] sm:$0xff] %vm311, 0.0
      %335 = vst.msk [vmem:[%s319 + $0xb8] sm:$0xff] %vm311, 0.0
      %336 = vst.msk [vmem:[%s319 + $0x8] sm:$0xff] %vm311, %v303
      %337 = vst.msk [vmem:[%s319 + $0x20] sm:$0xff] %vm311, %v304
      %338 = vst.msk [vmem:[%s319 + $0x38] sm:$0xff] %vm311, %v305
      %339 = vst.msk [vmem:[%s319 + $0x50] sm:$0xff] %vm311, %v306
      %340 = vst.msk [vmem:[%s319 + $0x68] sm:$0xff] %vm311, %v307
      %341 = vst.msk [vmem:[%s319 + $0x80] sm:$0xff] %vm311, %v308
      %342 = vst.msk [vmem:[%s319 + $0x98] sm:$0xff] %vm311, %v309
      %343 = vst.msk [vmem:[%s319 + $0xb0] sm:$0xff] %vm311, %v310
      %v344 = vld [vmem:[%s4] sm:$0x1]
      %v346 = vlaneseq
      %v347 = vshrl.u32 %v346, 7
      %v348 = vsub.s32 0, %v347
      %v349 = vrot.slane %v344, %v348
      %v351 = vld [vmem:[#allocation2 + $0x7] sm:$0xff]
      %v352 = vld [vmem:[#allocation2 + $0x1f] sm:$0xff]
      %v353 = vld [vmem:[#allocation2 + $0x37] sm:$0xff]
      %v354 = vld [vmem:[#allocation2 + $0x4f] sm:$0xff]
      %v355 = vld [vmem:[#allocation2 + $0x67] sm:$0xff]
      %v356 = vld [vmem:[#allocation2 + $0x7f] sm:$0xff]
      %v357 = vld [vmem:[#allocation2 + $0x97] sm:$0xff]
      %v358 = vld [vmem:[#allocation2 + $0xaf] sm:$0xff]
      %v359 = vld [vmem:[%s3] sm:$0xff]
      %v360 = vld [vmem:[%s3 + $0x8] sm:$0xff]
      %v361 = vld [vmem:[%s3 + $0x10] sm:$0xff]
      %v362 = vld [vmem:[%s3 + $0x18] sm:$0xff]
      %v364 = vsel %vm311, %v351, 0
      %v367 = vsel %vm311, %v352, 0
      %v370 = vsel %vm311, %v353, 0
      %v373 = vsel %vm311, %v354, 0
      %v376 = vsel %vm311, %v355, 0
      %v379 = vsel %vm311, %v356, 0
      %v382 = vsel %vm311, %v357, 0
      %v385 = vsel %vm311, %v358, 0
      %387 = vmatprep.subr.mxu0 0.0
      %388 = vmatpush1.msra.mxu0 0.0
      %389 = vmatprep.subr.mxu0 0.0
      %390 = vmatpush1.msra.mxu0 0.0
      %391 = vmatprep.subr.mxu0 0.0
      %392 = vmatpush1.msra.mxu0 0.0
      %393 = vmatprep.subr.mxu0 0.0
      %394 = vmatpush1.msra.mxu0 0.0
      %395 = vmatprep.subr.mxu0 0.0
      %396 = vmatpush1.msra.mxu0 0.0
      %397 = vmatprep.subr.mxu0 0.0
      %398 = vmatpush1.msra.mxu0 0.0
      %399 = vmatprep.subr.mxu0 0.0
      %400 = vmatpush1.msra.mxu0 0.0
      %401 = vmatprep.subr.mxu0 0.0
      %402 = vmatpush1.msra.mxu0 0.0
      %403 = vmatprep.subr.mxu0 0.0
      %404 = vmatpush1.msra.mxu0 0.0
      %405 = vmatprep.subr.mxu0 0.0
      %406 = vmatpush1.msra.mxu0 0.0
      %407 = vmatprep.subr.mxu0 0.0
      %408 = vmatpush1.msra.mxu0 0.0
      %409 = vmatprep.subr.mxu0 0.0
      %410 = vmatpush1.msra.mxu0 0.0
      %411 = vmatprep.subr.mxu0 0.0
      %412 = vmatpush1.msra.mxu0 %v362
      %413 = vmatprep.subr.mxu0 0.0
      %414 = vmatpush1.msra.mxu0 %v361
      %415 = vmatprep.subr.mxu0 0.0
      %416 = vmatpush1.msra.mxu0 %v360
      %417 = vmatprep.subr.mxu0 0.0
      %418 = vmatpush1.msra.mxu0 %v359
      %419 = vmatprep.subr.mxu0 0.0
      %420 = vmatpush2.msra.mxu0 0.0
      %421 = vmatprep.subr.mxu0 0.0
      %422 = vmatpush2.msra.mxu0 0.0
      %423 = vmatprep.subr.mxu0 0.0
      %424 = vmatpush2.msra.mxu0 0.0
      %425 = vmatprep.subr.mxu0 0.0
      %426 = vmatpush2.msra.mxu0 0.0
      %427 = vmatprep.subr.mxu0 0.0
      %428 = vmatpush2.msra.mxu0 0.0
      %429 = vmatprep.subr.mxu0 0.0
      %430 = vmatpush2.msra.mxu0 0.0
      %431 = vmatprep.subr.mxu0 0.0
      %432 = vmatpush2.msra.mxu0 0.0
      %433 = vmatprep.subr.mxu0 0.0
      %434 = vmatpush2.msra.mxu0 0.0
      %435 = vmatprep.subr.mxu0 0.0
      %436 = vmatpush2.msra.mxu0 0.0
      %437 = vmatprep.subr.mxu0 0.0
      %438 = vmatpush2.msra.mxu0 0.0
      %439 = vmatprep.subr.mxu0 0.0
      %440 = vmatpush2.msra.mxu0 0.0
      %441 = vmatprep.subr.mxu0 0.0
      %442 = vmatpush2.msra.mxu0 0.0
      %443 = vmatprep.subr.mxu0 0.0
      %444 = vmatpush2.msra.mxu0 0.0
      %445 = vmatprep.subr.mxu0 0.0
      %446 = vmatpush2.msra.mxu0 0.0
      %447 = vmatprep.subr.mxu0 0.0
      %448 = vmatpush2.msra.mxu0 0.0
      %449 = vmatprep.subr.mxu0 0.0
      %450 = vmatpush2.msra.mxu0 0.0
      %451 = vmatprep.mubr.f32.mxu0 0.0
      %452 = vmatmul.mubr.f32.gmra.mxu0 %v364
      %v453 = vpop.f32.mrf.mxu0
      %v454 = vadd.f32 0.0, %v453
      %v455 = vpop.f32.mrf.mxu0
      %456 = vmatprep.mubr.f32.mxu0 0.0
      %457 = vmatmul.mubr.f32.gmra.mxu0 %v367
      %v458 = vpop.f32.mrf.mxu0
      %v459 = vadd.f32 0.0, %v458
      %v460 = vpop.f32.mrf.mxu0
      %461 = vmatprep.mubr.f32.mxu0 0.0
      %462 = vmatmul.mubr.f32.gmra.mxu0 %v370
      %v463 = vpop.f32.mrf.mxu0
      %v464 = vadd.f32 0.0, %v463
      %v465 = vpop.f32.mrf.mxu0
      %466 = vmatprep.mubr.f32.mxu0 0.0
      %467 = vmatmul.mubr.f32.gmra.mxu0 %v373
      %v468 = vpop.f32.mrf.mxu0
      %v469 = vadd.f32 0.0, %v468
      %v470 = vpop.f32.mrf.mxu0
      %471 = vmatprep.mubr.f32.mxu0 0.0
      %472 = vmatmul.mubr.f32.gmra.mxu0 %v376
      %v473 = vpop.f32.mrf.mxu0
      %v474 = vadd.f32 0.0, %v473
      %v475 = vpop.f32.mrf.mxu0
      %476 = vmatprep.mubr.f32.mxu0 0.0
      %477 = vmatmul.mubr.f32.gmra.mxu0 %v379
      %v478 = vpop.f32.mrf.mxu0
      %v479 = vadd.f32 0.0, %v478
      %v480 = vpop.f32.mrf.mxu0
      %481 = vmatprep.mubr.f32.mxu0 0.0
      %482 = vmatmul.mubr.f32.gmra.mxu0 %v382
      %v483 = vpop.f32.mrf.mxu0
      %v484 = vadd.f32 0.0, %v483
      %v485 = vpop.f32.mrf.mxu0
      %486 = vmatprep.mubr.f32.mxu0 0.0
      %487 = vmatmul.mubr.f32.gmra.mxu0 %v385
      %v488 = vpop.f32.mrf.mxu0
      %v489 = vadd.f32 0.0, %v488
      %v490 = vpop.f32.mrf.mxu0
      %491 = vdwg.mxu0
      %v492 = vadd.f32 %v349, %v454
      %v493 = vadd.f32 %v349, %v459
      %v494 = vadd.f32 %v349, %v464
      %v495 = vadd.f32 %v349, %v469
      %v496 = vadd.f32 %v349, %v474
      %v497 = vadd.f32 %v349, %v479
      %v498 = vadd.f32 %v349, %v484
      %v499 = vadd.f32 %v349, %v489
      %v500 = vld [vmem:[#allocation2 + $0x8] sm:$0xff]
      %v501 = vld [vmem:[#allocation2 + $0x20] sm:$0xff]
      %v502 = vld [vmem:[#allocation2 + $0x38] sm:$0xff]
      %v503 = vld [vmem:[#allocation2 + $0x50] sm:$0xff]
      %v504 = vld [vmem:[#allocation2 + $0x68] sm:$0xff]
      %v505 = vld [vmem:[#allocation2 + $0x80] sm:$0xff]
      %v506 = vld [vmem:[#allocation2 + $0x98] sm:$0xff]
      %v507 = vld [vmem:[#allocation2 + $0xb0] sm:$0xff]
      %s508 = scalar_lea.vmem %s3, 32
      %v509 = vld [vmem:[%s508] sm:$0xff]
      %v510 = vld [vmem:[%s508 + $0x8] sm:$0xff]
      %v511 = vld [vmem:[%s508 + $0x10] sm:$0xff]
      %v512 = vld [vmem:[%s508 + $0x18] sm:$0xff]
      %v514 = vsel %vm311, %v500, 0
      %v517 = vsel %vm311, %v501, 0
      %v520 = vsel %vm311, %v502, 0
      %v523 = vsel %vm311, %v503, 0
      %v526 = vsel %vm311, %v504, 0
      %v529 = vsel %vm311, %v505, 0
      %v532 = vsel %vm311, %v506, 0
      %v535 = vsel %vm311, %v507, 0
      %537 = vmatprep.subr.mxu0 0.0
      %538 = vmatpush1.msra.mxu0 0.0
      %539 = vmatprep.subr.mxu0 0.0
      %540 = vmatpush1.msra.mxu0 0.0
      %541 = vmatprep.subr.mxu0 0.0
      %542 = vmatpush1.msra.mxu0 0.0
      %543 = vmatprep.subr.mxu0 0.0
      %544 = vmatpush1.msra.mxu0 0.0
      %545 = vmatprep.subr.mxu0 0.0
      %546 = vmatpush1.msra.mxu0 0.0
      %547 = vmatprep.subr.mxu0 0.0
      %548 = vmatpush1.msra.mxu0 0.0
      %549 = vmatprep.subr.mxu0 0.0
      %550 = vmatpush1.msra.mxu0 0.0
      %551 = vmatprep.subr.mxu0 0.0
      %552 = vmatpush1.msra.mxu0 0.0
      %553 = vmatprep.subr.mxu0 0.0
      %554 = vmatpush1.msra.mxu0 0.0
      %555 = vmatprep.subr.mxu0 0.0
      %556 = vmatpush1.msra.mxu0 0.0
      %557 = vmatprep.subr.mxu0 0.0
      %558 = vmatpush1.msra.mxu0 0.0
      %559 = vmatprep.subr.mxu0 0.0
      %560 = vmatpush1.msra.mxu0 0.0
      %561 = vmatprep.subr.mxu0 0.0
      %562 = vmatpush1.msra.mxu0 %v512
      %563 = vmatprep.subr.mxu0 0.0
      %564 = vmatpush1.msra.mxu0 %v511
      %565 = vmatprep.subr.mxu0 0.0
      %566 = vmatpush1.msra.mxu0 %v510
      %567 = vmatprep.subr.mxu0 0.0
      %568 = vmatpush1.msra.mxu0 %v509
      %569 = vmatprep.subr.mxu0 0.0
      %570 = vmatpush2.msra.mxu0 0.0
      %571 = vmatprep.subr.mxu0 0.0
      %572 = vmatpush2.msra.mxu0 0.0
      %573 = vmatprep.subr.mxu0 0.0
      %574 = vmatpush2.msra.mxu0 0.0
      %575 = vmatprep.subr.mxu0 0.0
      %576 = vmatpush2.msra.mxu0 0.0
      %577 = vmatprep.subr.mxu0 0.0
      %578 = vmatpush2.msra.mxu0 0.0
      %579 = vmatprep.subr.mxu0 0.0
      %580 = vmatpush2.msra.mxu0 0.0
      %581 = vmatprep.subr.mxu0 0.0
      %582 = vmatpush2.msra.mxu0 0.0
      %583 = vmatprep.subr.mxu0 0.0
      %584 = vmatpush2.msra.mxu0 0.0
      %585 = vmatprep.subr.mxu0 0.0
      %586 = vmatpush2.msra.mxu0 0.0
      %587 = vmatprep.subr.mxu0 0.0
      %588 = vmatpush2.msra.mxu0 0.0
      %589 = vmatprep.subr.mxu0 0.0
      %590 = vmatpush2.msra.mxu0 0.0
      %591 = vmatprep.subr.mxu0 0.0
      %592 = vmatpush2.msra.mxu0 0.0
      %593 = vmatprep.subr.mxu0 0.0
      %594 = vmatpush2.msra.mxu0 0.0
      %595 = vmatprep.subr.mxu0 0.0
      %596 = vmatpush2.msra.mxu0 0.0
      %597 = vmatprep.subr.mxu0 0.0
      %598 = vmatpush2.msra.mxu0 0.0
      %599 = vmatprep.subr.mxu0 0.0
      %600 = vmatpush2.msra.mxu0 0.0
      %601 = vmatprep.mubr.f32.mxu0 0.0
      %602 = vmatmul.mubr.f32.gmra.mxu0 %v514
      %v603 = vpop.f32.mrf.mxu0
      %v604 = vadd.f32 0.0, %v603
      %v605 = vpop.f32.mrf.mxu0
      %606 = vmatprep.mubr.f32.mxu0 0.0
      %607 = vmatmul.mubr.f32.gmra.mxu0 %v517
      %v608 = vpop.f32.mrf.mxu0
      %v609 = vadd.f32 0.0, %v608
      %v610 = vpop.f32.mrf.mxu0
      %611 = vmatprep.mubr.f32.mxu0 0.0
      %612 = vmatmul.mubr.f32.gmra.mxu0 %v520
      %v613 = vpop.f32.mrf.mxu0
      %v614 = vadd.f32 0.0, %v613
      %v615 = vpop.f32.mrf.mxu0
      %616 = vmatprep.mubr.f32.mxu0 0.0
      %617 = vmatmul.mubr.f32.gmra.mxu0 %v523
      %v618 = vpop.f32.mrf.mxu0
      %v619 = vadd.f32 0.0, %v618
      %v620 = vpop.f32.mrf.mxu0
      %621 = vmatprep.mubr.f32.mxu0 0.0
      %622 = vmatmul.mubr.f32.gmra.mxu0 %v526
      %v623 = vpop.f32.mrf.mxu0
      %v624 = vadd.f32 0.0, %v623
      %v625 = vpop.f32.mrf.mxu0
      %626 = vmatprep.mubr.f32.mxu0 0.0
      %627 = vmatmul.mubr.f32.gmra.mxu0 %v529
      %v628 = vpop.f32.mrf.mxu0
      %v629 = vadd.f32 0.0, %v628
      %v630 = vpop.f32.mrf.mxu0
      %631 = vmatprep.mubr.f32.mxu0 0.0
      %632 = vmatmul.mubr.f32.gmra.mxu0 %v532
      %v633 = vpop.f32.mrf.mxu0
      %v634 = vadd.f32 0.0, %v633
      %v635 = vpop.f32.mrf.mxu0
      %636 = vmatprep.mubr.f32.mxu0 0.0
      %637 = vmatmul.mubr.f32.gmra.mxu0 %v535
      %v638 = vpop.f32.mrf.mxu0
      %v639 = vadd.f32 0.0, %v638
      %v640 = vpop.f32.mrf.mxu0
      %641 = vdwg.mxu0
      %v642 = vadd.f32 %v492, %v604
      %v643 = vadd.f32 %v493, %v609
      %v644 = vadd.f32 %v494, %v614
      %v645 = vadd.f32 %v495, %v619
      %v646 = vadd.f32 %v496, %v624
      %v647 = vadd.f32 %v497, %v629
      %v648 = vadd.f32 %v498, %v634
      %v649 = vadd.f32 %v499, %v639
      %v650 = vld [vmem:[#allocation2 + $0x9] sm:$0xff]
      %v651 = vld [vmem:[#allocation2 + $0x21] sm:$0xff]
      %v652 = vld [vmem:[#allocation2 + $0x39] sm:$0xff]
      %v653 = vld [vmem:[#allocation2 + $0x51] sm:$0xff]
      %v654 = vld [vmem:[#allocation2 + $0x69] sm:$0xff]
      %v655 = vld [vmem:[#allocation2 + $0x81] sm:$0xff]
      %v656 = vld [vmem:[#allocation2 + $0x99] sm:$0xff]
      %v657 = vld [vmem:[#allocation2 + $0xb1] sm:$0xff]
      %s658 = scalar_lea.vmem %s3, 64
      %v659 = vld [vmem:[%s658] sm:$0xff]
      %v660 = vld [vmem:[%s658 + $0x8] sm:$0xff]
      %v661 = vld [vmem:[%s658 + $0x10] sm:$0xff]
      %v662 = vld [vmem:[%s658 + $0x18] sm:$0xff]
      %v664 = vsel %vm311, %v650, 0
      %v667 = vsel %vm311, %v651, 0
      %v670 = vsel %vm311, %v652, 0
      %v673 = vsel %vm311, %v653, 0
      %v676 = vsel %vm311, %v654, 0
      %v679 = vsel %vm311, %v655, 0
      %v682 = vsel %vm311, %v656, 0
      %v685 = vsel %vm311, %v657, 0
      %687 = vmatprep.subr.mxu0 0.0
      %688 = vmatpush1.msra.mxu0 0.0
      %689 = vmatprep.subr.mxu0 0.0
      %690 = vmatpush1.msra.mxu0 0.0
      %691 = vmatprep.subr.mxu0 0.0
      %692 = vmatpush1.msra.mxu0 0.0
      %693 = vmatprep.subr.mxu0 0.0
      %694 = vmatpush1.msra.mxu0 0.0
      %695 = vmatprep.subr.mxu0 0.0
      %696 = vmatpush1.msra.mxu0 0.0
      %697 = vmatprep.subr.mxu0 0.0
      %698 = vmatpush1.msra.mxu0 0.0
      %699 = vmatprep.subr.mxu0 0.0
      %700 = vmatpush1.msra.mxu0 0.0
      %701 = vmatprep.subr.mxu0 0.0
      %702 = vmatpush1.msra.mxu0 0.0
      %703 = vmatprep.subr.mxu0 0.0
      %704 = vmatpush1.msra.mxu0 0.0
      %705 = vmatprep.subr.mxu0 0.0
      %706 = vmatpush1.msra.mxu0 0.0
      %707 = vmatprep.subr.mxu0 0.0
      %708 = vmatpush1.msra.mxu0 0.0
      %709 = vmatprep.subr.mxu0 0.0
      %710 = vmatpush1.msra.mxu0 0.0
      %711 = vmatprep.subr.mxu0 0.0
      %712 = vmatpush1.msra.mxu0 %v662
      %713 = vmatprep.subr.mxu0 0.0
      %714 = vmatpush1.msra.mxu0 %v661
      %715 = vmatprep.subr.mxu0 0.0
      %716 = vmatpush1.msra.mxu0 %v660
      %717 = vmatprep.subr.mxu0 0.0
      %718 = vmatpush1.msra.mxu0 %v659
      %719 = vmatprep.subr.mxu0 0.0
      %720 = vmatpush2.msra.mxu0 0.0
      %721 = vmatprep.subr.mxu0 0.0
      %722 = vmatpush2.msra.mxu0 0.0
      %723 = vmatprep.subr.mxu0 0.0
      %724 = vmatpush2.msra.mxu0 0.0
      %725 = vmatprep.subr.mxu0 0.0
      %726 = vmatpush2.msra.mxu0 0.0
      %727 = vmatprep.subr.mxu0 0.0
      %728 = vmatpush2.msra.mxu0 0.0
      %729 = vmatprep.subr.mxu0 0.0
      %730 = vmatpush2.msra.mxu0 0.0
      %731 = vmatprep.subr.mxu0 0.0
      %732 = vmatpush2.msra.mxu0 0.0
      %733 = vmatprep.subr.mxu0 0.0
      %734 = vmatpush2.msra.mxu0 0.0
      %735 = vmatprep.subr.mxu0 0.0
      %736 = vmatpush2.msra.mxu0 0.0
      %737 = vmatprep.subr.mxu0 0.0
      %738 = vmatpush2.msra.mxu0 0.0
      %739 = vmatprep.subr.mxu0 0.0
      %740 = vmatpush2.msra.mxu0 0.0
      %741 = vmatprep.subr.mxu0 0.0
      %742 = vmatpush2.msra.mxu0 0.0
      %743 = vmatprep.subr.mxu0 0.0
      %744 = vmatpush2.msra.mxu0 0.0
      %745 = vmatprep.subr.mxu0 0.0
      %746 = vmatpush2.msra.mxu0 0.0
      %747 = vmatprep.subr.mxu0 0.0
      %748 = vmatpush2.msra.mxu0 0.0
      %749 = vmatprep.subr.mxu0 0.0
      %750 = vmatpush2.msra.mxu0 0.0
      %751 = vmatprep.mubr.f32.mxu0 0.0
      %752 = vmatmul.mubr.f32.gmra.mxu0 %v664
      %v753 = vpop.f32.mrf.mxu0
      %v754 = vadd.f32 0.0, %v753
      %v755 = vpop.f32.mrf.mxu0
      %756 = vmatprep.mubr.f32.mxu0 0.0
      %757 = vmatmul.mubr.f32.gmra.mxu0 %v667
      %v758 = vpop.f32.mrf.mxu0
      %v759 = vadd.f32 0.0, %v758
      %v760 = vpop.f32.mrf.mxu0
      %761 = vmatprep.mubr.f32.mxu0 0.0
      %762 = vmatmul.mubr.f32.gmra.mxu0 %v670
      %v763 = vpop.f32.mrf.mxu0
      %v764 = vadd.f32 0.0, %v763
      %v765 = vpop.f32.mrf.mxu0
      %766 = vmatprep.mubr.f32.mxu0 0.0
      %767 = vmatmul.mubr.f32.gmra.mxu0 %v673
      %v768 = vpop.f32.mrf.mxu0
      %v769 = vadd.f32 0.0, %v768
      %v770 = vpop.f32.mrf.mxu0
      %771 = vmatprep.mubr.f32.mxu0 0.0
      %772 = vmatmul.mubr.f32.gmra.mxu0 %v676
      %v773 = vpop.f32.mrf.mxu0
      %v774 = vadd.f32 0.0, %v773
      %v775 = vpop.f32.mrf.mxu0
      %776 = vmatprep.mubr.f32.mxu0 0.0
      %777 = vmatmul.mubr.f32.gmra.mxu0 %v679
      %v778 = vpop.f32.mrf.mxu0
      %v779 = vadd.f32 0.0, %v778
      %v780 = vpop.f32.mrf.mxu0
      %781 = vmatprep.mubr.f32.mxu0 0.0
      %782 = vmatmul.mubr.f32.gmra.mxu0 %v682
      %v783 = vpop.f32.mrf.mxu0
      %v784 = vadd.f32 0.0, %v783
      %v785 = vpop.f32.mrf.mxu0
      %786 = vmatprep.mubr.f32.mxu0 0.0
      %787 = vmatmul.mubr.f32.gmra.mxu0 %v685
      %v788 = vpop.f32.mrf.mxu0
      %v789 = vadd.f32 0.0, %v788
      %v790 = vpop.f32.mrf.mxu0
      %791 = vdwg.mxu0
      %v792 = vadd.f32 %v642, %v754
      %v793 = vadd.f32 %v643, %v759
      %v794 = vadd.f32 %v644, %v764
      %v795 = vadd.f32 %v645, %v769
      %v796 = vadd.f32 %v646, %v774
      %v797 = vadd.f32 %v647, %v779
      %v798 = vadd.f32 %v648, %v784
      %v799 = vadd.f32 %v649, %v789
      %v800 = vld [vmem:[%s319 + $0x7] sm:$0xff]
      %v801 = vld [vmem:[%s319 + $0x1f] sm:$0xff]
      %v802 = vld [vmem:[%s319 + $0x37] sm:$0xff]
      %v803 = vld [vmem:[%s319 + $0x4f] sm:$0xff]
      %v804 = vld [vmem:[%s319 + $0x67] sm:$0xff]
      %v805 = vld [vmem:[%s319 + $0x7f] sm:$0xff]
      %v806 = vld [vmem:[%s319 + $0x97] sm:$0xff]
      %v807 = vld [vmem:[%s319 + $0xaf] sm:$0xff]
      %s808 = scalar_lea.vmem %s3, 96
      %v809 = vld [vmem:[%s808] sm:$0xff]
      %v810 = vld [vmem:[%s808 + $0x8] sm:$0xff]
      %v811 = vld [vmem:[%s808 + $0x10] sm:$0xff]
      %v812 = vld [vmem:[%s808 + $0x18] sm:$0xff]
      %v814 = vsel %vm311, %v800, 0
      %v817 = vsel %vm311, %v801, 0
      %v820 = vsel %vm311, %v802, 0
      %v823 = vsel %vm311, %v803, 0
      %v826 = vsel %vm311, %v804, 0
      %v829 = vsel %vm311, %v805, 0
      %v832 = vsel %vm311, %v806, 0
      %v835 = vsel %vm311, %v807, 0
      %837 = vmatprep.subr.mxu0 0.0
      %838 = vmatpush1.msra.mxu0 0.0
      %839 = vmatprep.subr.mxu0 0.0
      %840 = vmatpush1.msra.mxu0 0.0
      %841 = vmatprep.subr.mxu0 0.0
      %842 = vmatpush1.msra.mxu0 0.0
      %843 = vmatprep.subr.mxu0 0.0
      %844 = vmatpush1.msra.mxu0 0.0
      %845 = vmatprep.subr.mxu0 0.0
      %846 = vmatpush1.msra.mxu0 0.0
      %847 = vmatprep.subr.mxu0 0.0
      %848 = vmatpush1.msra.mxu0 0.0
      %849 = vmatprep.subr.mxu0 0.0
      %850 = vmatpush1.msra.mxu0 0.0
      %851 = vmatprep.subr.mxu0 0.0
      %852 = vmatpush1.msra.mxu0 0.0
      %853 = vmatprep.subr.mxu0 0.0
      %854 = vmatpush1.msra.mxu0 0.0
      %855 = vmatprep.subr.mxu0 0.0
      %856 = vmatpush1.msra.mxu0 0.0
      %857 = vmatprep.subr.mxu0 0.0
      %858 = vmatpush1.msra.mxu0 0.0
      %859 = vmatprep.subr.mxu0 0.0
      %860 = vmatpush1.msra.mxu0 0.0
      %861 = vmatprep.subr.mxu0 0.0
      %862 = vmatpush1.msra.mxu0 %v812
      %863 = vmatprep.subr.mxu0 0.0
      %864 = vmatpush1.msra.mxu0 %v811
      %865 = vmatprep.subr.mxu0 0.0
      %866 = vmatpush1.msra.mxu0 %v810
      %867 = vmatprep.subr.mxu0 0.0
      %868 = vmatpush1.msra.mxu0 %v809
      %869 = vmatprep.subr.mxu0 0.0
      %870 = vmatpush2.msra.mxu0 0.0
      %871 = vmatprep.subr.mxu0 0.0
      %872 = vmatpush2.msra.mxu0 0.0
      %873 = vmatprep.subr.mxu0 0.0
      %874 = vmatpush2.msra.mxu0 0.0
      %875 = vmatprep.subr.mxu0 0.0
      %876 = vmatpush2.msra.mxu0 0.0
      %877 = vmatprep.subr.mxu0 0.0
      %878 = vmatpush2.msra.mxu0 0.0
      %879 = vmatprep.subr.mxu0 0.0
      %880 = vmatpush2.msra.mxu0 0.0
      %881 = vmatprep.subr.mxu0 0.0
      %882 = vmatpush2.msra.mxu0 0.0
      %883 = vmatprep.subr.mxu0 0.0
      %884 = vmatpush2.msra.mxu0 0.0
      %885 = vmatprep.subr.mxu0 0.0
      %886 = vmatpush2.msra.mxu0 0.0
      %887 = vmatprep.subr.mxu0 0.0
      %888 = vmatpush2.msra.mxu0 0.0
      %889 = vmatprep.subr.mxu0 0.0
      %890 = vmatpush2.msra.mxu0 0.0
      %891 = vmatprep.subr.mxu0 0.0
      %892 = vmatpush2.msra.mxu0 0.0
      %893 = vmatprep.subr.mxu0 0.0
      %894 = vmatpush2.msra.mxu0 0.0
      %895 = vmatprep.subr.mxu0 0.0
      %896 = vmatpush2.msra.mxu0 0.0
      %897 = vmatprep.subr.mxu0 0.0
      %898 = vmatpush2.msra.mxu0 0.0
      %899 = vmatprep.subr.mxu0 0.0
      %900 = vmatpush2.msra.mxu0 0.0
      %901 = vmatprep.mubr.f32.mxu0 0.0
      %902 = vmatmul.mubr.f32.gmra.mxu0 %v814
      %v903 = vpop.f32.mrf.mxu0
      %v904 = vadd.f32 0.0, %v903
      %v905 = vpop.f32.mrf.mxu0
      %906 = vmatprep.mubr.f32.mxu0 0.0
      %907 = vmatmul.mubr.f32.gmra.mxu0 %v817
      %v908 = vpop.f32.mrf.mxu0
      %v909 = vadd.f32 0.0, %v908
      %v910 = vpop.f32.mrf.mxu0
      %911 = vmatprep.mubr.f32.mxu0 0.0
      %912 = vmatmul.mubr.f32.gmra.mxu0 %v820
      %v913 = vpop.f32.mrf.mxu0
      %v914 = vadd.f32 0.0, %v913
      %v915 = vpop.f32.mrf.mxu0
      %916 = vmatprep.mubr.f32.mxu0 0.0
      %917 = vmatmul.mubr.f32.gmra.mxu0 %v823
      %v918 = vpop.f32.mrf.mxu0
      %v919 = vadd.f32 0.0, %v918
      %v920 = vpop.f32.mrf.mxu0
      %921 = vmatprep.mubr.f32.mxu0 0.0
      %922 = vmatmul.mubr.f32.gmra.mxu0 %v826
      %v923 = vpop.f32.mrf.mxu0
      %v924 = vadd.f32 0.0, %v923
      %v925 = vpop.f32.mrf.mxu0
      %926 = vmatprep.mubr.f32.mxu0 0.0
      %927 = vmatmul.mubr.f32.gmra.mxu0 %v829
      %v928 = vpop.f32.mrf.mxu0
      %v929 = vadd.f32 0.0, %v928
      %v930 = vpop.f32.mrf.mxu0
      %931 = vmatprep.mubr.f32.mxu0 0.0
      %932 = vmatmul.mubr.f32.gmra.mxu0 %v832
      %v933 = vpop.f32.mrf.mxu0
      %v934 = vadd.f32 0.0, %v933
      %v935 = vpop.f32.mrf.mxu0
      %936 = vmatprep.mubr.f32.mxu0 0.0
      %937 = vmatmul.mubr.f32.gmra.mxu0 %v835
      %v938 = vpop.f32.mrf.mxu0
      %v939 = vadd.f32 0.0, %v938
      %v940 = vpop.f32.mrf.mxu0
      %941 = vdwg.mxu0
      %v942 = vadd.f32 %v792, %v904
      %v943 = vadd.f32 %v793, %v909
      %v944 = vadd.f32 %v794, %v914
      %v945 = vadd.f32 %v795, %v919
      %v946 = vadd.f32 %v796, %v924
      %v947 = vadd.f32 %v797, %v929
      %v948 = vadd.f32 %v798, %v934
      %v949 = vadd.f32 %v799, %v939
      %v950 = vld [vmem:[%s319 + $0x8] sm:$0xff]
      %v951 = vld [vmem:[%s319 + $0x20] sm:$0xff]
      %v952 = vld [vmem:[%s319 + $0x38] sm:$0xff]
      %v953 = vld [vmem:[%s319 + $0x50] sm:$0xff]
      %v954 = vld [vmem:[%s319 + $0x68] sm:$0xff]
      %v955 = vld [vmem:[%s319 + $0x80] sm:$0xff]
      %v956 = vld [vmem:[%s319 + $0x98] sm:$0xff]
      %v957 = vld [vmem:[%s319 + $0xb0] sm:$0xff]
      %s958 = scalar_lea.vmem %s3, 128
      %v959 = vld [vmem:[%s958] sm:$0xff]
      %v960 = vld [vmem:[%s958 + $0x8] sm:$0xff]
      %v961 = vld [vmem:[%s958 + $0x10] sm:$0xff]
      %v962 = vld [vmem:[%s958 + $0x18] sm:$0xff]
      %v964 = vsel %vm311, %v950, 0
      %v967 = vsel %vm311, %v951, 0
      %v970 = vsel %vm311, %v952, 0
      %v973 = vsel %vm311, %v953, 0
      %v976 = vsel %vm311, %v954, 0
      %v979 = vsel %vm311, %v955, 0
      %v982 = vsel %vm311, %v956, 0
      %v985 = vsel %vm311, %v957, 0
      %987 = vmatprep.subr.mxu0 0.0
      %988 = vmatpush1.msra.mxu0 0.0
      %989 = vmatprep.subr.mxu0 0.0
      %990 = vmatpush1.msra.mxu0 0.0
      %991 = vmatprep.subr.mxu0 0.0
      %992 = vmatpush1.msra.mxu0 0.0
      %993 = vmatprep.subr.mxu0 0.0
      %994 = vmatpush1.msra.mxu0 0.0
      %995 = vmatprep.subr.mxu0 0.0
      %996 = vmatpush1.msra.mxu0 0.0
      %997 = vmatprep.subr.mxu0 0.0
      %998 = vmatpush1.msra.mxu0 0.0
      %999 = vmatprep.subr.mxu0 0.0
      %1000 = vmatpush1.msra.mxu0 0.0
      %1001 = vmatprep.subr.mxu0 0.0
      %1002 = vmatpush1.msra.mxu0 0.0
      %1003 = vmatprep.subr.mxu0 0.0
      %1004 = vmatpush1.msra.mxu0 0.0
      %1005 = vmatprep.subr.mxu0 0.0
      %1006 = vmatpush1.msra.mxu0 0.0
      %1007 = vmatprep.subr.mxu0 0.0
      %1008 = vmatpush1.msra.mxu0 0.0
      %1009 = vmatprep.subr.mxu0 0.0
      %1010 = vmatpush1.msra.mxu0 0.0
      %1011 = vmatprep.subr.mxu0 0.0
      %1012 = vmatpush1.msra.mxu0 %v962
      %1013 = vmatprep.subr.mxu0 0.0
      %1014 = vmatpush1.msra.mxu0 %v961
      %1015 = vmatprep.subr.mxu0 0.0
      %1016 = vmatpush1.msra.mxu0 %v960
      %1017 = vmatprep.subr.mxu0 0.0
      %1018 = vmatpush1.msra.mxu0 %v959
      %1019 = vmatprep.subr.mxu0 0.0
      %1020 = vmatpush2.msra.mxu0 0.0
      %1021 = vmatprep.subr.mxu0 0.0
      %1022 = vmatpush2.msra.mxu0 0.0
      %1023 = vmatprep.subr.mxu0 0.0
      %1024 = vmatpush2.msra.mxu0 0.0
      %1025 = vmatprep.subr.mxu0 0.0
      %1026 = vmatpush2.msra.mxu0 0.0
      %1027 = vmatprep.subr.mxu0 0.0
      %1028 = vmatpush2.msra.mxu0 0.0
      %1029 = vmatprep.subr.mxu0 0.0
      %1030 = vmatpush2.msra.mxu0 0.0
      %1031 = vmatprep.subr.mxu0 0.0
      %1032 = vmatpush2.msra.mxu0 0.0
      %1033 = vmatprep.subr.mxu0 0.0
      %1034 = vmatpush2.msra.mxu0 0.0
      %1035 = vmatprep.subr.mxu0 0.0
      %1036 = vmatpush2.msra.mxu0 0.0
      %1037 = vmatprep.subr.mxu0 0.0
      %1038 = vmatpush2.msra.mxu0 0.0
      %1039 = vmatprep.subr.mxu0 0.0
      %1040 = vmatpush2.msra.mxu0 0.0
      %1041 = vmatprep.subr.mxu0 0.0
      %1042 = vmatpush2.msra.mxu0 0.0
      %1043 = vmatprep.subr.mxu0 0.0
      %1044 = vmatpush2.msra.mxu0 0.0
      %1045 = vmatprep.subr.mxu0 0.0
      %1046 = vmatpush2.msra.mxu0 0.0
      %1047 = vmatprep.subr.mxu0 0.0
      %1048 = vmatpush2.msra.mxu0 0.0
      %1049 = vmatprep.subr.mxu0 0.0
      %1050 = vmatpush2.msra.mxu0 0.0
      %1051 = vmatprep.mubr.f32.mxu0 0.0
      %1052 = vmatmul.mubr.f32.gmra.mxu0 %v964
      %v1053 = vpop.f32.mrf.mxu0
      %v1054 = vadd.f32 0.0, %v1053
      %v1055 = vpop.f32.mrf.mxu0
      %1056 = vmatprep.mubr.f32.mxu0 0.0
      %1057 = vmatmul.mubr.f32.gmra.mxu0 %v967
      %v1058 = vpop.f32.mrf.mxu0
      %v1059 = vadd.f32 0.0, %v1058
      %v1060 = vpop.f32.mrf.mxu0
      %1061 = vmatprep.mubr.f32.mxu0 0.0
      %1062 = vmatmul.mubr.f32.gmra.mxu0 %v970
      %v1063 = vpop.f32.mrf.mxu0
      %v1064 = vadd.f32 0.0, %v1063
      %v1065 = vpop.f32.mrf.mxu0
      %1066 = vmatprep.mubr.f32.mxu0 0.0
      %1067 = vmatmul.mubr.f32.gmra.mxu0 %v973
      %v1068 = vpop.f32.mrf.mxu0
      %v1069 = vadd.f32 0.0, %v1068
      %v1070 = vpop.f32.mrf.mxu0
      %1071 = vmatprep.mubr.f32.mxu0 0.0
      %1072 = vmatmul.mubr.f32.gmra.mxu0 %v976
      %v1073 = vpop.f32.mrf.mxu0
      %v1074 = vadd.f32 0.0, %v1073
      %v1075 = vpop.f32.mrf.mxu0
      %1076 = vmatprep.mubr.f32.mxu0 0.0
      %1077 = vmatmul.mubr.f32.gmra.mxu0 %v979
      %v1078 = vpop.f32.mrf.mxu0
      %v1079 = vadd.f32 0.0, %v1078
      %v1080 = vpop.f32.mrf.mxu0
      %1081 = vmatprep.mubr.f32.mxu0 0.0
      %1082 = vmatmul.mubr.f32.gmra.mxu0 %v982
      %v1083 = vpop.f32.mrf.mxu0
      %v1084 = vadd.f32 0.0, %v1083
      %v1085 = vpop.f32.mrf.mxu0
      %1086 = vmatprep.mubr.f32.mxu0 0.0
      %1087 = vmatmul.mubr.f32.gmra.mxu0 %v985
      %v1088 = vpop.f32.mrf.mxu0
      %v1089 = vadd.f32 0.0, %v1088
      %v1090 = vpop.f32.mrf.mxu0
      %1091 = vdwg.mxu0
      %v1092 = vadd.f32 %v942, %v1054
      %v1093 = vadd.f32 %v943, %v1059
      %v1094 = vadd.f32 %v944, %v1064
      %v1095 = vadd.f32 %v945, %v1069
      %v1096 = vadd.f32 %v946, %v1074
      %v1097 = vadd.f32 %v947, %v1079
      %v1098 = vadd.f32 %v948, %v1084
      %v1099 = vadd.f32 %v949, %v1089
      %v1100 = vld [vmem:[%s319 + $0x9] sm:$0xff]
      %v1101 = vld [vmem:[%s319 + $0x21] sm:$0xff]
      %v1102 = vld [vmem:[%s319 + $0x39] sm:$0xff]
      %v1103 = vld [vmem:[%s319 + $0x51] sm:$0xff]
      %v1104 = vld [vmem:[%s319 + $0x69] sm:$0xff]
      %v1105 = vld [vmem:[%s319 + $0x81] sm:$0xff]
      %v1106 = vld [vmem:[%s319 + $0x99] sm:$0xff]
      %v1107 = vld [vmem:[%s319 + $0xb1] sm:$0xff]
      %s1108 = scalar_lea.vmem %s3, 160
      %v1109 = vld [vmem:[%s1108] sm:$0xff]
      %v1110 = vld [vmem:[%s1108 + $0x8] sm:$0xff]
      %v1111 = vld [vmem:[%s1108 + $0x10] sm:$0xff]
      %v1112 = vld [vmem:[%s1108 + $0x18] sm:$0xff]
      %v1114 = vsel %vm311, %v1100, 0
      %v1117 = vsel %vm311, %v1101, 0
      %v1120 = vsel %vm311, %v1102, 0
      %v1123 = vsel %vm311, %v1103, 0
      %v1126 = vsel %vm311, %v1104, 0
      %v1129 = vsel %vm311, %v1105, 0
      %v1132 = vsel %vm311, %v1106, 0
      %v1135 = vsel %vm311, %v1107, 0
      %1137 = vmatprep.subr.mxu0 0.0
      %1138 = vmatpush1.msra.mxu0 0.0
      %1139 = vmatprep.subr.mxu0 0.0
      %1140 = vmatpush1.msra.mxu0 0.0
      %1141 = vmatprep.subr.mxu0 0.0
      %1142 = vmatpush1.msra.mxu0 0.0
      %1143 = vmatprep.subr.mxu0 0.0
      %1144 = vmatpush1.msra.mxu0 0.0
      %1145 = vmatprep.subr.mxu0 0.0
      %1146 = vmatpush1.msra.mxu0 0.0
      %1147 = vmatprep.subr.mxu0 0.0
      %1148 = vmatpush1.msra.mxu0 0.0
      %1149 = vmatprep.subr.mxu0 0.0
      %1150 = vmatpush1.msra.mxu0 0.0
      %1151 = vmatprep.subr.mxu0 0.0
      %1152 = vmatpush1.msra.mxu0 0.0
      %1153 = vmatprep.subr.mxu0 0.0
      %1154 = vmatpush1.msra.mxu0 0.0
      %1155 = vmatprep.subr.mxu0 0.0
      %1156 = vmatpush1.msra.mxu0 0.0
      %1157 = vmatprep.subr.mxu0 0.0
      %1158 = vmatpush1.msra.mxu0 0.0
      %1159 = vmatprep.subr.mxu0 0.0
      %1160 = vmatpush1.msra.mxu0 0.0
      %1161 = vmatprep.subr.mxu0 0.0
      %1162 = vmatpush1.msra.mxu0 %v1112
      %1163 = vmatprep.subr.mxu0 0.0
      %1164 = vmatpush1.msra.mxu0 %v1111
      %1165 = vmatprep.subr.mxu0 0.0
      %1166 = vmatpush1.msra.mxu0 %v1110
      %1167 = vmatprep.subr.mxu0 0.0
      %1168 = vmatpush1.msra.mxu0 %v1109
      %1169 = vmatprep.subr.mxu0 0.0
      %1170 = vmatpush2.msra.mxu0 0.0
      %1171 = vmatprep.subr.mxu0 0.0
      %1172 = vmatpush2.msra.mxu0 0.0
      %1173 = vmatprep.subr.mxu0 0.0
      %1174 = vmatpush2.msra.mxu0 0.0
      %1175 = vmatprep.subr.mxu0 0.0
      %1176 = vmatpush2.msra.mxu0 0.0
      %1177 = vmatprep.subr.mxu0 0.0
      %1178 = vmatpush2.msra.mxu0 0.0
      %1179 = vmatprep.subr.mxu0 0.0
      %1180 = vmatpush2.msra.mxu0 0.0
      %1181 = vmatprep.subr.mxu0 0.0
      %1182 = vmatpush2.msra.mxu0 0.0
      %1183 = vmatprep.subr.mxu0 0.0
      %1184 = vmatpush2.msra.mxu0 0.0
      %1185 = vmatprep.subr.mxu0 0.0
      %1186 = vmatpush2.msra.mxu0 0.0
      %1187 = vmatprep.subr.mxu0 0.0
      %1188 = vmatpush2.msra.mxu0 0.0
      %1189 = vmatprep.subr.mxu0 0.0
      %1190 = vmatpush2.msra.mxu0 0.0
      %1191 = vmatprep.subr.mxu0 0.0
      %1192 = vmatpush2.msra.mxu0 0.0
      %1193 = vmatprep.subr.mxu0 0.0
      %1194 = vmatpush2.msra.mxu0 0.0
      %1195 = vmatprep.subr.mxu0 0.0
      %1196 = vmatpush2.msra.mxu0 0.0
      %1197 = vmatprep.subr.mxu0 0.0
      %1198 = vmatpush2.msra.mxu0 0.0
      %1199 = vmatprep.subr.mxu0 0.0
      %1200 = vmatpush2.msra.mxu0 0.0
      %1201 = vmatprep.mubr.f32.mxu0 0.0
      %1202 = vmatmul.mubr.f32.gmra.mxu0 %v1114
      %v1203 = vpop.f32.mrf.mxu0
      %v1204 = vadd.f32 0.0, %v1203
      %v1205 = vpop.f32.mrf.mxu0
      %1206 = vmatprep.mubr.f32.mxu0 0.0
      %1207 = vmatmul.mubr.f32.gmra.mxu0 %v1117
      %v1208 = vpop.f32.mrf.mxu0
      %v1209 = vadd.f32 0.0, %v1208
      %v1210 = vpop.f32.mrf.mxu0
      %1211 = vmatprep.mubr.f32.mxu0 0.0
      %1212 = vmatmul.mubr.f32.gmra.mxu0 %v1120
      %v1213 = vpop.f32.mrf.mxu0
      %v1214 = vadd.f32 0.0, %v1213
      %v1215 = vpop.f32.mrf.mxu0
      %1216 = vmatprep.mubr.f32.mxu0 0.0
      %1217 = vmatmul.mubr.f32.gmra.mxu0 %v1123
      %v1218 = vpop.f32.mrf.mxu0
      %v1219 = vadd.f32 0.0, %v1218
      %v1220 = vpop.f32.mrf.mxu0
      %1221 = vmatprep.mubr.f32.mxu0 0.0
      %1222 = vmatmul.mubr.f32.gmra.mxu0 %v1126
      %v1223 = vpop.f32.mrf.mxu0
      %v1224 = vadd.f32 0.0, %v1223
      %v1225 = vpop.f32.mrf.mxu0
      %1226 = vmatprep.mubr.f32.mxu0 0.0
      %1227 = vmatmul.mubr.f32.gmra.mxu0 %v1129
      %v1228 = vpop.f32.mrf.mxu0
      %v1229 = vadd.f32 0.0, %v1228
      %v1230 = vpop.f32.mrf.mxu0
      %1231 = vmatprep.mubr.f32.mxu0 0.0
      %1232 = vmatmul.mubr.f32.gmra.mxu0 %v1132
      %v1233 = vpop.f32.mrf.mxu0
      %v1234 = vadd.f32 0.0, %v1233
      %v1235 = vpop.f32.mrf.mxu0
      %1236 = vmatprep.mubr.f32.mxu0 0.0
      %1237 = vmatmul.mubr.f32.gmra.mxu0 %v1135
      %v1238 = vpop.f32.mrf.mxu0
      %v1239 = vadd.f32 0.0, %v1238
      %v1240 = vpop.f32.mrf.mxu0
      %1241 = vdwg.mxu0
      %v1242 = vadd.f32 %v1092, %v1204
      %v1243 = vadd.f32 %v1093, %v1209
      %v1244 = vadd.f32 %v1094, %v1214
      %v1245 = vadd.f32 %v1095, %v1219
      %v1246 = vadd.f32 %v1096, %v1224
      %v1247 = vadd.f32 %v1097, %v1229
      %v1248 = vadd.f32 %v1098, %v1234
      %v1249 = vadd.f32 %v1099, %v1239
      %s1250 = scalar_lea.vmem [#allocation2], 48
      %v1251 = vld [vmem:[%s1250 + $0x7] sm:$0xff]
      %v1252 = vld [vmem:[%s1250 + $0x1f] sm:$0xff]
      %v1253 = vld [vmem:[%s1250 + $0x37] sm:$0xff]
      %v1254 = vld [vmem:[%s1250 + $0x4f] sm:$0xff]
      %v1255 = vld [vmem:[%s1250 + $0x67] sm:$0xff]
      %v1256 = vld [vmem:[%s1250 + $0x7f] sm:$0xff]
      %v1257 = vld [vmem:[%s1250 + $0x97] sm:$0xff]
      %v1258 = vld [vmem:[%s1250 + $0xaf] sm:$0xff]
      %s1259 = scalar_lea.vmem %s3, 192
      %v1260 = vld [vmem:[%s1259] sm:$0xff]
      %v1261 = vld [vmem:[%s1259 + $0x8] sm:$0xff]
      %v1262 = vld [vmem:[%s1259 + $0x10] sm:$0xff]
      %v1263 = vld [vmem:[%s1259 + $0x18] sm:$0xff]
      %v1265 = vsel %vm311, %v1251, 0
      %v1268 = vsel %vm311, %v1252, 0
      %v1271 = vsel %vm311, %v1253, 0
      %v1274 = vsel %vm311, %v1254, 0
      %v1277 = vsel %vm311, %v1255, 0
      %v1280 = vsel %vm311, %v1256, 0
      %v1283 = vsel %vm311, %v1257, 0
      %v1286 = vsel %vm311, %v1258, 0
      %1288 = vmatprep.subr.mxu0 0.0
      %1289 = vmatpush1.msra.mxu0 0.0
      %1290 = vmatprep.subr.mxu0 0.0
      %1291 = vmatpush1.msra.mxu0 0.0
      %1292 = vmatprep.subr.mxu0 0.0
      %1293 = vmatpush1.msra.mxu0 0.0
      %1294 = vmatprep.subr.mxu0 0.0
      %1295 = vmatpush1.msra.mxu0 0.0
      %1296 = vmatprep.subr.mxu0 0.0
      %1297 = vmatpush1.msra.mxu0 0.0
      %1298 = vmatprep.subr.mxu0 0.0
      %1299 = vmatpush1.msra.mxu0 0.0
      %1300 = vmatprep.subr.mxu0 0.0
      %1301 = vmatpush1.msra.mxu0 0.0
      %1302 = vmatprep.subr.mxu0 0.0
      %1303 = vmatpush1.msra.mxu0 0.0
      %1304 = vmatprep.subr.mxu0 0.0
      %1305 = vmatpush1.msra.mxu0 0.0
      %1306 = vmatprep.subr.mxu0 0.0
      %1307 = vmatpush1.msra.mxu0 0.0
      %1308 = vmatprep.subr.mxu0 0.0
      %1309 = vmatpush1.msra.mxu0 0.0
      %1310 = vmatprep.subr.mxu0 0.0
      %1311 = vmatpush1.msra.mxu0 0.0
      %1312 = vmatprep.subr.mxu0 0.0
      %1313 = vmatpush1.msra.mxu0 %v1263
      %1314 = vmatprep.subr.mxu0 0.0
      %1315 = vmatpush1.msra.mxu0 %v1262
      %1316 = vmatprep.subr.mxu0 0.0
      %1317 = vmatpush1.msra.mxu0 %v1261
      %1318 = vmatprep.subr.mxu0 0.0
      %1319 = vmatpush1.msra.mxu0 %v1260
      %1320 = vmatprep.subr.mxu0 0.0
      %1321 = vmatpush2.msra.mxu0 0.0
      %1322 = vmatprep.subr.mxu0 0.0
      %1323 = vmatpush2.msra.mxu0 0.0
      %1324 = vmatprep.subr.mxu0 0.0
      %1325 = vmatpush2.msra.mxu0 0.0
      %1326 = vmatprep.subr.mxu0 0.0
      %1327 = vmatpush2.msra.mxu0 0.0
      %1328 = vmatprep.subr.mxu0 0.0
      %1329 = vmatpush2.msra.mxu0 0.0
      %1330 = vmatprep.subr.mxu0 0.0
      %1331 = vmatpush2.msra.mxu0 0.0
      %1332 = vmatprep.subr.mxu0 0.0
      %1333 = vmatpush2.msra.mxu0 0.0
      %1334 = vmatprep.subr.mxu0 0.0
      %1335 = vmatpush2.msra.mxu0 0.0
      %1336 = vmatprep.subr.mxu0 0.0
      %1337 = vmatpush2.msra.mxu0 0.0
      %1338 = vmatprep.subr.mxu0 0.0
      %1339 = vmatpush2.msra.mxu0 0.0
      %1340 = vmatprep.subr.mxu0 0.0
      %1341 = vmatpush2.msra.mxu0 0.0
      %1342 = vmatprep.subr.mxu0 0.0
      %1343 = vmatpush2.msra.mxu0 0.0
      %1344 = vmatprep.subr.mxu0 0.0
      %1345 = vmatpush2.msra.mxu0 0.0
      %1346 = vmatprep.subr.mxu0 0.0
      %1347 = vmatpush2.msra.mxu0 0.0
      %1348 = vmatprep.subr.mxu0 0.0
      %1349 = vmatpush2.msra.mxu0 0.0
      %1350 = vmatprep.subr.mxu0 0.0
      %1351 = vmatpush2.msra.mxu0 0.0
      %1352 = vmatprep.mubr.f32.mxu0 0.0
      %1353 = vmatmul.mubr.f32.gmra.mxu0 %v1265
      %v1354 = vpop.f32.mrf.mxu0
      %v1355 = vadd.f32 0.0, %v1354
      %v1356 = vpop.f32.mrf.mxu0
      %1357 = vmatprep.mubr.f32.mxu0 0.0
      %1358 = vmatmul.mubr.f32.gmra.mxu0 %v1268
      %v1359 = vpop.f32.mrf.mxu0
      %v1360 = vadd.f32 0.0, %v1359
      %v1361 = vpop.f32.mrf.mxu0
      %1362 = vmatprep.mubr.f32.mxu0 0.0
      %1363 = vmatmul.mubr.f32.gmra.mxu0 %v1271
      %v1364 = vpop.f32.mrf.mxu0
      %v1365 = vadd.f32 0.0, %v1364
      %v1366 = vpop.f32.mrf.mxu0
      %1367 = vmatprep.mubr.f32.mxu0 0.0
      %1368 = vmatmul.mubr.f32.gmra.mxu0 %v1274
      %v1369 = vpop.f32.mrf.mxu0
      %v1370 = vadd.f32 0.0, %v1369
      %v1371 = vpop.f32.mrf.mxu0
      %1372 = vmatprep.mubr.f32.mxu0 0.0
      %1373 = vmatmul.mubr.f32.gmra.mxu0 %v1277
      %v1374 = vpop.f32.mrf.mxu0
      %v1375 = vadd.f32 0.0, %v1374
      %v1376 = vpop.f32.mrf.mxu0
      %1377 = vmatprep.mubr.f32.mxu0 0.0
      %1378 = vmatmul.mubr.f32.gmra.mxu0 %v1280
      %v1379 = vpop.f32.mrf.mxu0
      %v1380 = vadd.f32 0.0, %v1379
      %v1381 = vpop.f32.mrf.mxu0
      %1382 = vmatprep.mubr.f32.mxu0 0.0
      %1383 = vmatmul.mubr.f32.gmra.mxu0 %v1283
      %v1384 = vpop.f32.mrf.mxu0
      %v1385 = vadd.f32 0.0, %v1384
      %v1386 = vpop.f32.mrf.mxu0
      %1387 = vmatprep.mubr.f32.mxu0 0.0
      %1388 = vmatmul.mubr.f32.gmra.mxu0 %v1286
      %v1389 = vpop.f32.mrf.mxu0
      %v1390 = vadd.f32 0.0, %v1389
      %v1391 = vpop.f32.mrf.mxu0
      %1392 = vdwg.mxu0
      %v1393 = vadd.f32 %v1242, %v1355
      %v1394 = vadd.f32 %v1243, %v1360
      %v1395 = vadd.f32 %v1244, %v1365
      %v1396 = vadd.f32 %v1245, %v1370
      %v1397 = vadd.f32 %v1246, %v1375
      %v1398 = vadd.f32 %v1247, %v1380
      %v1399 = vadd.f32 %v1248, %v1385
      %v1400 = vadd.f32 %v1249, %v1390
      %v1401 = vld [vmem:[%s1250 + $0x8] sm:$0xff]
      %v1402 = vld [vmem:[%s1250 + $0x20] sm:$0xff]
      %v1403 = vld [vmem:[%s1250 + $0x38] sm:$0xff]
      %v1404 = vld [vmem:[%s1250 + $0x50] sm:$0xff]
      %v1405 = vld [vmem:[%s1250 + $0x68] sm:$0xff]
      %v1406 = vld [vmem:[%s1250 + $0x80] sm:$0xff]
      %v1407 = vld [vmem:[%s1250 + $0x98] sm:$0xff]
      %v1408 = vld [vmem:[%s1250 + $0xb0] sm:$0xff]
      %s1409 = scalar_lea.vmem %s3, 224
      %v1410 = vld [vmem:[%s1409] sm:$0xff]
      %v1411 = vld [vmem:[%s1409 + $0x8] sm:$0xff]
      %v1412 = vld [vmem:[%s1409 + $0x10] sm:$0xff]
      %v1413 = vld [vmem:[%s1409 + $0x18] sm:$0xff]
      %v1415 = vsel %vm311, %v1401, 0
      %v1418 = vsel %vm311, %v1402, 0
      %v1421 = vsel %vm311, %v1403, 0
      %v1424 = vsel %vm311, %v1404, 0
      %v1427 = vsel %vm311, %v1405, 0
      %v1430 = vsel %vm311, %v1406, 0
      %v1433 = vsel %vm311, %v1407, 0
      %v1436 = vsel %vm311, %v1408, 0
      %1438 = vmatprep.subr.mxu0 0.0
      %1439 = vmatpush1.msra.mxu0 0.0
      %1440 = vmatprep.subr.mxu0 0.0
      %1441 = vmatpush1.msra.mxu0 0.0
      %1442 = vmatprep.subr.mxu0 0.0
      %1443 = vmatpush1.msra.mxu0 0.0
      %1444 = vmatprep.subr.mxu0 0.0
      %1445 = vmatpush1.msra.mxu0 0.0
      %1446 = vmatprep.subr.mxu0 0.0
      %1447 = vmatpush1.msra.mxu0 0.0
      %1448 = vmatprep.subr.mxu0 0.0
      %1449 = vmatpush1.msra.mxu0 0.0
      %1450 = vmatprep.subr.mxu0 0.0
      %1451 = vmatpush1.msra.mxu0 0.0
      %1452 = vmatprep.subr.mxu0 0.0
      %1453 = vmatpush1.msra.mxu0 0.0
      %1454 = vmatprep.subr.mxu0 0.0
      %1455 = vmatpush1.msra.mxu0 0.0
      %1456 = vmatprep.subr.mxu0 0.0
      %1457 = vmatpush1.msra.mxu0 0.0
      %1458 = vmatprep.subr.mxu0 0.0
      %1459 = vmatpush1.msra.mxu0 0.0
      %1460 = vmatprep.subr.mxu0 0.0
      %1461 = vmatpush1.msra.mxu0 0.0
      %1462 = vmatprep.subr.mxu0 0.0
      %1463 = vmatpush1.msra.mxu0 %v1413
      %1464 = vmatprep.subr.mxu0 0.0
      %1465 = vmatpush1.msra.mxu0 %v1412
      %1466 = vmatprep.subr.mxu0 0.0
      %1467 = vmatpush1.msra.mxu0 %v1411
      %1468 = vmatprep.subr.mxu0 0.0
      %1469 = vmatpush1.msra.mxu0 %v1410
      %1470 = vmatprep.subr.mxu0 0.0
      %1471 = vmatpush2.msra.mxu0 0.0
      %1472 = vmatprep.subr.mxu0 0.0
      %1473 = vmatpush2.msra.mxu0 0.0
      %1474 = vmatprep.subr.mxu0 0.0
      %1475 = vmatpush2.msra.mxu0 0.0
      %1476 = vmatprep.subr.mxu0 0.0
      %1477 = vmatpush2.msra.mxu0 0.0
      %1478 = vmatprep.subr.mxu0 0.0
      %1479 = vmatpush2.msra.mxu0 0.0
      %1480 = vmatprep.subr.mxu0 0.0
      %1481 = vmatpush2.msra.mxu0 0.0
      %1482 = vmatprep.subr.mxu0 0.0
      %1483 = vmatpush2.msra.mxu0 0.0
      %1484 = vmatprep.subr.mxu0 0.0
      %1485 = vmatpush2.msra.mxu0 0.0
      %1486 = vmatprep.subr.mxu0 0.0
      %1487 = vmatpush2.msra.mxu0 0.0
      %1488 = vmatprep.subr.mxu0 0.0
      %1489 = vmatpush2.msra.mxu0 0.0
      %1490 = vmatprep.subr.mxu0 0.0
      %1491 = vmatpush2.msra.mxu0 0.0
      %1492 = vmatprep.subr.mxu0 0.0
      %1493 = vmatpush2.msra.mxu0 0.0
      %1494 = vmatprep.subr.mxu0 0.0
      %1495 = vmatpush2.msra.mxu0 0.0
      %1496 = vmatprep.subr.mxu0 0.0
      %1497 = vmatpush2.msra.mxu0 0.0
      %1498 = vmatprep.subr.mxu0 0.0
      %1499 = vmatpush2.msra.mxu0 0.0
      %1500 = vmatprep.subr.mxu0 0.0
      %1501 = vmatpush2.msra.mxu0 0.0
      %1502 = vmatprep.mubr.f32.mxu0 0.0
      %1503 = vmatmul.mubr.f32.gmra.mxu0 %v1415
      %v1504 = vpop.f32.mrf.mxu0
      %v1505 = vadd.f32 0.0, %v1504
      %v1506 = vpop.f32.mrf.mxu0
      %1507 = vmatprep.mubr.f32.mxu0 0.0
      %1508 = vmatmul.mubr.f32.gmra.mxu0 %v1418
      %v1509 = vpop.f32.mrf.mxu0
      %v1510 = vadd.f32 0.0, %v1509
      %v1511 = vpop.f32.mrf.mxu0
      %1512 = vmatprep.mubr.f32.mxu0 0.0
      %1513 = vmatmul.mubr.f32.gmra.mxu0 %v1421
      %v1514 = vpop.f32.mrf.mxu0
      %v1515 = vadd.f32 0.0, %v1514
      %v1516 = vpop.f32.mrf.mxu0
      %1517 = vmatprep.mubr.f32.mxu0 0.0
      %1518 = vmatmul.mubr.f32.gmra.mxu0 %v1424
      %v1519 = vpop.f32.mrf.mxu0
      %v1520 = vadd.f32 0.0, %v1519
      %v1521 = vpop.f32.mrf.mxu0
      %1522 = vmatprep.mubr.f32.mxu0 0.0
      %1523 = vmatmul.mubr.f32.gmra.mxu0 %v1427
      %v1524 = vpop.f32.mrf.mxu0
      %v1525 = vadd.f32 0.0, %v1524
      %v1526 = vpop.f32.mrf.mxu0
      %1527 = vmatprep.mubr.f32.mxu0 0.0
      %1528 = vmatmul.mubr.f32.gmra.mxu0 %v1430
      %v1529 = vpop.f32.mrf.mxu0
      %v1530 = vadd.f32 0.0, %v1529
      %v1531 = vpop.f32.mrf.mxu0
      %1532 = vmatprep.mubr.f32.mxu0 0.0
      %1533 = vmatmul.mubr.f32.gmra.mxu0 %v1433
      %v1534 = vpop.f32.mrf.mxu0
      %v1535 = vadd.f32 0.0, %v1534
      %v1536 = vpop.f32.mrf.mxu0
      %1537 = vmatprep.mubr.f32.mxu0 0.0
      %1538 = vmatmul.mubr.f32.gmra.mxu0 %v1436
      %v1539 = vpop.f32.mrf.mxu0
      %v1540 = vadd.f32 0.0, %v1539
      %v1541 = vpop.f32.mrf.mxu0
      %1542 = vdwg.mxu0
      %v1543 = vadd.f32 %v1393, %v1505
      %v1544 = vadd.f32 %v1394, %v1510
      %v1545 = vadd.f32 %v1395, %v1515
      %v1546 = vadd.f32 %v1396, %v1520
      %v1547 = vadd.f32 %v1397, %v1525
      %v1548 = vadd.f32 %v1398, %v1530
      %v1549 = vadd.f32 %v1399, %v1535
      %v1550 = vadd.f32 %v1400, %v1540
      %v1551 = vld [vmem:[%s1250 + $0x9] sm:$0xff]
      %v1552 = vld [vmem:[%s1250 + $0x21] sm:$0xff]
      %v1553 = vld [vmem:[%s1250 + $0x39] sm:$0xff]
      %v1554 = vld [vmem:[%s1250 + $0x51] sm:$0xff]
      %v1555 = vld [vmem:[%s1250 + $0x69] sm:$0xff]
      %v1556 = vld [vmem:[%s1250 + $0x81] sm:$0xff]
      %v1557 = vld [vmem:[%s1250 + $0x99] sm:$0xff]
      %v1558 = vld [vmem:[%s1250 + $0xb1] sm:$0xff]
      %s1559 = scalar_lea.vmem %s3, 256
      %v1560 = vld [vmem:[%s1559] sm:$0xff]
      %v1561 = vld [vmem:[%s1559 + $0x8] sm:$0xff]
      %v1562 = vld [vmem:[%s1559 + $0x10] sm:$0xff]
      %v1563 = vld [vmem:[%s1559 + $0x18] sm:$0xff]
      %v1565 = vsel %vm311, %v1551, 0
      %v1568 = vsel %vm311, %v1552, 0
      %v1571 = vsel %vm311, %v1553, 0
      %v1574 = vsel %vm311, %v1554, 0
      %v1577 = vsel %vm311, %v1555, 0
      %v1580 = vsel %vm311, %v1556, 0
      %v1583 = vsel %vm311, %v1557, 0
      %v1586 = vsel %vm311, %v1558, 0
      %1588 = vmatprep.subr.mxu0 0.0
      %1589 = vmatpush1.msra.mxu0 0.0
      %1590 = vmatprep.subr.mxu0 0.0
      %1591 = vmatpush1.msra.mxu0 0.0
      %1592 = vmatprep.subr.mxu0 0.0
      %1593 = vmatpush1.msra.mxu0 0.0
      %1594 = vmatprep.subr.mxu0 0.0
      %1595 = vmatpush1.msra.mxu0 0.0
      %1596 = vmatprep.subr.mxu0 0.0
      %1597 = vmatpush1.msra.mxu0 0.0
      %1598 = vmatprep.subr.mxu0 0.0
      %1599 = vmatpush1.msra.mxu0 0.0
      %1600 = vmatprep.subr.mxu0 0.0
      %1601 = vmatpush1.msra.mxu0 0.0
      %1602 = vmatprep.subr.mxu0 0.0
      %1603 = vmatpush1.msra.mxu0 0.0
      %1604 = vmatprep.subr.mxu0 0.0
      %1605 = vmatpush1.msra.mxu0 0.0
      %1606 = vmatprep.subr.mxu0 0.0
      %1607 = vmatpush1.msra.mxu0 0.0
      %1608 = vmatprep.subr.mxu0 0.0
      %1609 = vmatpush1.msra.mxu0 0.0
      %1610 = vmatprep.subr.mxu0 0.0
      %1611 = vmatpush1.msra.mxu0 0.0
      %1612 = vmatprep.subr.mxu0 0.0
      %1613 = vmatpush1.msra.mxu0 %v1563
      %1614 = vmatprep.subr.mxu0 0.0
      %1615 = vmatpush1.msra.mxu0 %v1562
      %1616 = vmatprep.subr.mxu0 0.0
      %1617 = vmatpush1.msra.mxu0 %v1561
      %1618 = vmatprep.subr.mxu0 0.0
      %1619 = vmatpush1.msra.mxu0 %v1560
      %1620 = vmatprep.subr.mxu0 0.0
      %1621 = vmatpush2.msra.mxu0 0.0
      %1622 = vmatprep.subr.mxu0 0.0
      %1623 = vmatpush2.msra.mxu0 0.0
      %1624 = vmatprep.subr.mxu0 0.0
      %1625 = vmatpush2.msra.mxu0 0.0
      %1626 = vmatprep.subr.mxu0 0.0
      %1627 = vmatpush2.msra.mxu0 0.0
      %1628 = vmatprep.subr.mxu0 0.0
      %1629 = vmatpush2.msra.mxu0 0.0
      %1630 = vmatprep.subr.mxu0 0.0
      %1631 = vmatpush2.msra.mxu0 0.0
      %1632 = vmatprep.subr.mxu0 0.0
      %1633 = vmatpush2.msra.mxu0 0.0
      %1634 = vmatprep.subr.mxu0 0.0
      %1635 = vmatpush2.msra.mxu0 0.0
      %1636 = vmatprep.subr.mxu0 0.0
      %1637 = vmatpush2.msra.mxu0 0.0
      %1638 = vmatprep.subr.mxu0 0.0
      %1639 = vmatpush2.msra.mxu0 0.0
      %1640 = vmatprep.subr.mxu0 0.0
      %1641 = vmatpush2.msra.mxu0 0.0
      %1642 = vmatprep.subr.mxu0 0.0
      %1643 = vmatpush2.msra.mxu0 0.0
      %1644 = vmatprep.subr.mxu0 0.0
      %1645 = vmatpush2.msra.mxu0 0.0
      %1646 = vmatprep.subr.mxu0 0.0
      %1647 = vmatpush2.msra.mxu0 0.0
      %1648 = vmatprep.subr.mxu0 0.0
      %1649 = vmatpush2.msra.mxu0 0.0
      %1650 = vmatprep.subr.mxu0 0.0
      %1651 = vmatpush2.msra.mxu0 0.0
      %1652 = vmatprep.mubr.f32.mxu0 0.0
      %1653 = vmatmul.mubr.f32.gmra.mxu0 %v1565
      %v1654 = vpop.f32.mrf.mxu0
      %v1655 = vadd.f32 0.0, %v1654
      %v1656 = vpop.f32.mrf.mxu0
      %1657 = vmatprep.mubr.f32.mxu0 0.0
      %1658 = vmatmul.mubr.f32.gmra.mxu0 %v1568
      %v1659 = vpop.f32.mrf.mxu0
      %v1660 = vadd.f32 0.0, %v1659
      %v1661 = vpop.f32.mrf.mxu0
      %1662 = vmatprep.mubr.f32.mxu0 0.0
      %1663 = vmatmul.mubr.f32.gmra.mxu0 %v1571
      %v1664 = vpop.f32.mrf.mxu0
      %v1665 = vadd.f32 0.0, %v1664
      %v1666 = vpop.f32.mrf.mxu0
      %1667 = vmatprep.mubr.f32.mxu0 0.0
      %1668 = vmatmul.mubr.f32.gmra.mxu0 %v1574
      %v1669 = vpop.f32.mrf.mxu0
      %v1670 = vadd.f32 0.0, %v1669
      %v1671 = vpop.f32.mrf.mxu0
      %1672 = vmatprep.mubr.f32.mxu0 0.0
      %1673 = vmatmul.mubr.f32.gmra.mxu0 %v1577
      %v1674 = vpop.f32.mrf.mxu0
      %v1675 = vadd.f32 0.0, %v1674
      %v1676 = vpop.f32.mrf.mxu0
      %1677 = vmatprep.mubr.f32.mxu0 0.0
      %1678 = vmatmul.mubr.f32.gmra.mxu0 %v1580
      %v1679 = vpop.f32.mrf.mxu0
      %v1680 = vadd.f32 0.0, %v1679
      %v1681 = vpop.f32.mrf.mxu0
      %1682 = vmatprep.mubr.f32.mxu0 0.0
      %1683 = vmatmul.mubr.f32.gmra.mxu0 %v1583
      %v1684 = vpop.f32.mrf.mxu0
      %v1685 = vadd.f32 0.0, %v1684
      %v1686 = vpop.f32.mrf.mxu0
      %1687 = vmatprep.mubr.f32.mxu0 0.0
      %1688 = vmatmul.mubr.f32.gmra.mxu0 %v1586
      %v1689 = vpop.f32.mrf.mxu0
      %v1690 = vadd.f32 0.0, %v1689
      %v1691 = vpop.f32.mrf.mxu0
      %1692 = vdwg.mxu0
      %v1693 = vadd.f32 %v1543, %v1655
      %v1694 = vadd.f32 %v1544, %v1660
      %v1695 = vadd.f32 %v1545, %v1665
      %v1696 = vadd.f32 %v1546, %v1670
      %v1697 = vadd.f32 %v1547, %v1675
      %v1698 = vadd.f32 %v1548, %v1680
      %v1699 = vadd.f32 %v1549, %v1685
      %v1700 = vadd.f32 %v1550, %v1690
      %1701 = vst [vmem:[%s224] sm:$0xff] %v1693
      %1702 = vst [vmem:[%s224 + $0x8] sm:$0xff] %v1694
      %1703 = vst [vmem:[%s224 + $0x10] sm:$0xff] %v1695
      %1704 = vst [vmem:[%s224 + $0x18] sm:$0xff] %v1696
      %1705 = vst [vmem:[%s224 + $0x20] sm:$0xff] %v1697
      %1706 = vst [vmem:[%s224 + $0x28] sm:$0xff] %v1698
      %1707 = vst [vmem:[%s224 + $0x30] sm:$0xff] %v1699
      %1708 = vst [vmem:[%s224 + $0x38] sm:$0xff] %v1700
      %p1709 = scmp.lt.s32.totalorder %s16, 1
      %s1710 = scalar_select %p1709, %s16, 1
      %s1711 = smul.addr %s1710, 8
      %s1712 = smul.addr %s1711, 8
      %s1713 = scalar_lea.vmem %s5, %s1712
      // Predicated region
      $region41: #{dense_unit_forward.1} parent=39 // pred_check
        %p1714 = pneg %p144
      $region42: #{dense_unit_forward.1} parent=39 // pred_check_branch
        %1716 = sbr.rel (%p1714) target = $region44
      $region43: #{dense_unit_forward.1} parent=39 // pred_region
        _
      $region44: #{dense_unit_forward.1} parent=39 // pred_fallthru
        _
    $region40: #{dense_unit_forward.1} parent=5 // pred_fallthru
      _
    %p1717 = scmp.le.s32.totalorder 2, %s11
    // Predicated region
    $region45: #{dense_unit_forward.1} parent=5 // pred_check
      %p1718 = pneg %p1717
    $region46: #{dense_unit_forward.1} parent=5 // pred_check_branch
      %1720 = sbr.rel (%p1718) target = $region48
    $region47: #{dense_unit_forward.1} parent=5 // pred_region
      %s1721 = ssub.s32 %s11, 2
      // Predicated region
      $region49: #{dense_unit_forward.1} parent=47 // pred_check
        %p1722 = pneg %p150
      $region50: #{dense_unit_forward.1} parent=47 // pred_check_branch
        %1724 = sbr.rel (%p1722) target = $region52
      $region51: #{dense_unit_forward.1} parent=47 // pred_region
        %p1725 = scmp.lt.s32.totalorder %s17, 1
        %s1726 = scalar_select %p1725, %s17, 1
        %s1727 = smul.addr %s1726, 8
        %s1728 = smul.addr %s1727, 8
        %s1729 = scalar_lea.vmem %s5, %s1728
      $region52: #{dense_unit_forward.1} parent=47 // pred_fallthru
        _
    $region48: #{dense_unit_forward.1} parent=5 // pred_fallthru
      _
  $region6: #{dense_unit_forward.1} parent=0 // loop_footer
    %s15 = sadd.s32 1, %s11
  $region7: #{dense_unit_forward.1} parent=0 // loop_footer_branch
    %10 = sbr.rel target = $region3
  $region8: #{dense_unit_forward.1} parent=0 // loop_exit
    _

</llo_original>
